<compile_context>
chip_gen: v7x
topology: tpu7x:2x2x1
jax: 0.10.0
libtpu: 0.0.40
codegen_flags: <defaults>
</compile_context>

<pallas_src>
import jax
import jax.numpy as jnp
import numpy as np
from jax.experimental import pallas as pl
from jax.experimental.pallas import tpu as pltpu

LN_EPS = 1e-5


def _vmem():
    return pl.BlockSpec(memory_space=pltpu.MemorySpace.VMEM)


# --------------------------------------------------------------------------
# Single fused kernel: projections + folded cross-attention + fusion head
# --------------------------------------------------------------------------
def _make_fused_kernel(M, H):
    """Builds the kernel for M modalities with hidden dim H."""

    def kernel(*refs):
        # ---- unpack refs (inputs first, then outputs) --------------------
        xs = refs[:M]                                        # M modality inputs
        pp = [refs[M + 4 * i: M + 4 * i + 4] for i in range(M)]  # (w,b,gamma,beta)
        base = M + 4 * M
        (wx_ref, bx_ref, w3_ref, b3_ref, wi2_ref, bi2_ref,
         wout_ref, bout_ref, go_ref, bo_ref) = refs[base:base + 10]
        att_ref, out_ref, imp_ref = refs[base + 10: base + 13]

        def layernorm(y, g, b):
            mu = jnp.mean(y, axis=-1, keepdims=True)
            var = jnp.mean((y - mu) ** 2, axis=-1, keepdims=True)
            return (y - mu) * jax.lax.rsqrt(var + LN_EPS) * g + b

        # ---- 1) per-modality projection: relu(LayerNorm(x @ W + b)) ------
        proj = []
        for i in range(M):
            w_ref, b_ref, g_ref, be_ref = pp[i]
            y = jnp.dot(xs[i][...], w_ref[...],
                        preferred_element_type=jnp.float32) + b_ref[...]
            proj.append(jnp.maximum(layernorm(y, g_ref[...], be_ref[...]), 0.0))
        proj_cat = jnp.concatenate(proj, axis=-1)            # [B, M*H]

        # ---- 2) folded cross-attention: one wide matmul + exact residual --
        #   attended_cat = proj_cat + proj_cat @ Wx + bx
        att = proj_cat + (jnp.dot(proj_cat, wx_ref[...],
                                  preferred_element_type=jnp.float32)
                          + bx_ref[...])
        att_ref[...] = att                                   # lane-dense [B, M*H]

        # ---- 3) fusion head ------------------------------------------------
        # merged importance-hidden / gate / content projection: one matmul
        h3 = jnp.dot(att, w3_ref[...],
                     preferred_element_type=jnp.float32) + b3_ref[...]
        h_imp = jnp.maximum(h3[:, 0:H], 0.0)                 # ReLU branch
        gate = jax.nn.sigmoid(h3[:, H:2 * H])                # sigmoid branch
        content = jnp.tanh(h3[:, 2 * H:3 * H])               # tanh branch

        # modality importance: Linear -> softmax (reciprocal on EUP)
        logits = jnp.dot(h_imp, wi2_ref[...],
                         preferred_element_type=jnp.float32) + bi2_ref[...]
        mx = jnp.max(logits, axis=-1, keepdims=True)
        e = jnp.exp(logits - mx)
        imp_ref[...] = e * pl.reciprocal(jnp.sum(e, axis=-1, keepdims=True),
                                         approx=True)

        # gated fusion + output Linear + LayerNorm
        fused = gate * content
        yo = jnp.dot(fused, wout_ref[...],
                     preferred_element_type=jnp.float32) + bout_ref[...]
        out_ref[...] = layernorm(yo, go_ref[...], bo_ref[...])

    return kernel


# --------------------------------------------------------------------------
# Parameter init (deterministic, synthetic) — mirrors the PyTorch layers
# --------------------------------------------------------------------------
def _dense(key, fan_in, fan_out, scale=0.05):
    kw, kb = jax.random.split(key)
    w = jax.random.normal(kw, (fan_in, fan_out), jnp.float32) * scale
    b = jax.random.normal(kb, (1, fan_out), jnp.float32) * scale
    return w, b


def _layernorm_params(key, dim, scale=0.05):
    kg, kb = jax.random.split(key)
    gamma = 1.0 + jax.random.normal(kg, (1, dim), jnp.float32) * scale
    beta = jax.random.normal(kb, (1, dim), jnp.float32) * scale
    return gamma, beta


def init_params(key, modality_dims, hidden_dim, output_dim):
    modality_list = sorted(modality_dims.keys())
    M = len(modality_list)
    params = {'proj': {}, 'xattn': {}, 'fusion': {}}
    ki = 0

    def nk():
        nonlocal ki
        ki += 1
        return jax.random.fold_in(key, ki)

    for m in modality_list:
        w, b = _dense(nk(), modality_dims[m], hidden_dim)
        gamma, beta = _layernorm_params(nk(), hidden_dim)
        params['proj'][m] = {'w': w, 'b': b, 'gamma': gamma, 'beta': beta}

    for m1 in modality_list:
        for m2 in modality_list:
            if m1 == m2:
                continue
            wv, bv = _dense(nk(), hidden_dim, hidden_dim)
            wo, bo = _dense(nk(), hidden_dim, hidden_dim)
            params['xattn'][f'{m1}_to_{m2}'] = {'wv': wv, 'bv': bv, 'wo': wo, 'bo': bo}

    wi1, bi1 = _dense(nk(), hidden_dim * M, hidden_dim)
    wi2, bi2 = _dense(nk(), hidden_dim, M)
    wg, bg = _dense(nk(), hidden_dim * M, hidden_dim)
    wc, bc = _dense(nk(), hidden_dim * M, hidden_dim)
    wout, bout = _dense(nk(), hidden_dim, output_dim)
    gamma, beta = _layernorm_params(nk(), output_dim)
    params['fusion'] = {'wi1': wi1, 'bi1': bi1, 'wi2': wi2, 'bi2': bi2,
                        'wg': wg, 'bg': bg, 'wc': wc, 'bc': bc,
                        'wout': wout, 'bout': bout, 'gamma': gamma, 'beta': beta}
    return params


# --------------------------------------------------------------------------
# One-time weight folding / packing (hoisted out of the forward pass)
# --------------------------------------------------------------------------
def prepare_fused_params(params, modality_list, hidden_dim):
    H = hidden_dim
    cols, bcols = [], []
    for m1 in modality_list:                      # output (column) block = m1
        col_blocks = []
        bcol = jnp.zeros((1, H), jnp.float32)
        for m2 in modality_list:                  # input (row) block = m2
            if m1 == m2:
                col_blocks.append(jnp.zeros((H, H), jnp.float32))
            else:
                xp = params['xattn'][f'{m1}_to_{m2}']
                col_blocks.append(xp['wv'] @ xp['wo'])          # folded pair weight
                bcol = bcol + xp['bv'] @ xp['wo'] + xp['bo']    # folded pair bias
        cols.append(jnp.concatenate(col_blocks, axis=0))        # [M*H, H]
        bcols.append(bcol)
    Wx = jnp.concatenate(cols, axis=1)                          # [M*H, M*H]
    bx = jnp.concatenate(bcols, axis=1)                         # [1, M*H]

    fp = params['fusion']
    W3 = jnp.concatenate([fp['wi1'], fp['wg'], fp['wc']], axis=1)   # [M*H, 3H]
    b3 = jnp.concatenate([fp['bi1'], fp['bg'], fp['bc']], axis=1)   # [1, 3H]
    return {'Wx': Wx, 'bx': bx, 'W3': W3, 'b3': b3}


# --------------------------------------------------------------------------
# Forward pass: one pallas_call + trivial wrapper slicing
# --------------------------------------------------------------------------
def fusion_forward(inputs, params, fused_params, modality_dims, hidden_dim,
                   output_dim):
    modality_list = sorted(modality_dims.keys())
    M = len(modality_list)
    H = hidden_dim
    B = inputs[modality_list[0]].shape[0]

    args = [inputs[m] for m in modality_list]
    for m in modality_list:
        p = params['proj'][m]
        args.extend([p['w'], p['b'], p['gamma'], p['beta']])
    fp = params['fusion']
    args.extend([fused_params['Wx'], fused_params['bx'],
                 fused_params['W3'], fused_params['b3'],
                 fp['wi2'], fp['bi2'], fp['wout'], fp['bout'],
                 fp['gamma'], fp['beta']])

    # TODO(synk): add a batch grid with dimension_semantics=("parallel",) once
    # batch sizes grow beyond a few rows (shards across v7x's 2 TensorCores).
    att_cat, out, imp = pl.pallas_call(
        _make_fused_kernel(M, H),
        out_shape=(jax.ShapeDtypeStruct((B, M * H), jnp.float32),
                   jax.ShapeDtypeStruct((B, output_dim), jnp.float32),
                   jax.ShapeDtypeStruct((B, M), jnp.float32)),
        in_specs=[_vmem()] * len(args),
        out_specs=(_vmem(), _vmem(), _vmem()),
    )(*args)

    attended = {m: att_cat[:, i * H:(i + 1) * H]
                for i, m in enumerate(modality_list)}
    return {'fused_representation': out,
            'modality_representations': attended,
            'modality_importance': imp}


# --------------------------------------------------------------------------
# Pure-JAX reference (un-folded math) for verification
# --------------------------------------------------------------------------
def reference_forward(inputs, params, modality_dims, output_dim):
    def ln(y, g, b):
        mu = y.mean(-1, keepdims=True)
        var = ((y - mu) ** 2).mean(-1, keepdims=True)
        return (y - mu) / jnp.sqrt(var + LN_EPS) * g + b

    modality_list = sorted(modality_dims.keys())
    projected = {}
    for m in modality_list:
        p = params['proj'][m]
        projected[m] = jnp.maximum(
            ln(inputs[m] @ p['w'] + p['b'], p['gamma'], p['beta']), 0.0)

    attended = {}
    for m1 in modality_list:
        acc = projected[m1]
        for m2 in modality_list:
            if m1 == m2:
                continue
            xp = params['xattn'][f'{m1}_to_{m2}']
            v = projected[m2] @ xp['wv'] + xp['bv']
            acc = acc + v @ xp['wo'] + xp['bo']
        attended[m1] = acc

    cat = jnp.concatenate([attended[m] for m in modality_list], axis=1)
    fp = params['fusion']
    h = jnp.maximum(cat @ fp['wi1'] + fp['bi1'], 0.0)
    imp = jax.nn.softmax(h @ fp['wi2'] + fp['bi2'], axis=1)
    gate = jax.nn.sigmoid(cat @ fp['wg'] + fp['bg'])
    content = jnp.tanh(cat @ fp['wc'] + fp['bc'])
    fused = gate * content
    out = ln(fused @ fp['wout'] + fp['bout'], fp['gamma'], fp['beta'])
    return {'fused_representation': out,
            'modality_representations': attended,
            'modality_importance': imp}


# --------------------------------------------------------------------------
if __name__ == "__main__":
    modality_dims = {"time_series": 24, "text": 48, "fundamentals": 16}
    hidden_dim = 32
    output_dim = 32
    batch = 4

    key = jax.random.PRNGKey(0)
    k_params, k_in = jax.random.split(key)
    params = init_params(k_params, modality_dims, hidden_dim, output_dim)
    modality_list = sorted(modality_dims.keys())
    fused_params = prepare_fused_params(params, modality_list, hidden_dim)

    inputs = {}
    for i, m in enumerate(modality_list):
        inputs[m] = jax.random.normal(jax.random.fold_in(k_in, i),
                                      (batch, modality_dims[m]), jnp.float32)

    result = fusion_forward(inputs, params, fused_params, modality_dims,
                            hidden_dim, output_dim)
    jax.block_until_ready(result)

    ref = reference_forward(inputs, params, modality_dims, output_dim)
    np.testing.assert_allclose(result['fused_representation'],
                               ref['fused_representation'], atol=2e-3, rtol=2e-3)
    np.testing.assert_allclose(result['modality_importance'],
                               ref['modality_importance'], atol=2e-3, rtol=2e-3)
    for m in result['modality_representations']:
        np.testing.assert_allclose(result['modality_representations'][m],
                                   ref['modality_representations'][m],
                                   atol=2e-3, rtol=2e-3)
    print("KERNEL_OK")
</pallas_src>

<mosaic_0001>
module attributes {stable_mosaic.version = 11 : i64} {
  func.func @kernel(%arg0: memref<4x16xf32, #tpu.memory_space<vmem>>, %arg1: memref<4x48xf32, #tpu.memory_space<vmem>>, %arg2: memref<4x24xf32, #tpu.memory_space<vmem>>, %arg3: memref<16x32xf32, #tpu.memory_space<vmem>>, %arg4: memref<1x32xf32, #tpu.memory_space<vmem>>, %arg5: memref<1x32xf32, #tpu.memory_space<vmem>>, %arg6: memref<1x32xf32, #tpu.memory_space<vmem>>, %arg7: memref<48x32xf32, #tpu.memory_space<vmem>>, %arg8: memref<1x32xf32, #tpu.memory_space<vmem>>, %arg9: memref<1x32xf32, #tpu.memory_space<vmem>>, %arg10: memref<1x32xf32, #tpu.memory_space<vmem>>, %arg11: memref<24x32xf32, #tpu.memory_space<vmem>>, %arg12: memref<1x32xf32, #tpu.memory_space<vmem>>, %arg13: memref<1x32xf32, #tpu.memory_space<vmem>>, %arg14: memref<1x32xf32, #tpu.memory_space<vmem>>, %arg15: memref<96x96xf32, #tpu.memory_space<vmem>>, %arg16: memref<1x96xf32, #tpu.memory_space<vmem>>, %arg17: memref<96x96xf32, #tpu.memory_space<vmem>>, %arg18: memref<1x96xf32, #tpu.memory_space<vmem>>, %arg19: memref<32x3xf32, #tpu.memory_space<vmem>>, %arg20: memref<1x3xf32, #tpu.memory_space<vmem>>, %arg21: memref<32x32xf32, #tpu.memory_space<vmem>>, %arg22: memref<1x32xf32, #tpu.memory_space<vmem>>, %arg23: memref<1x32xf32, #tpu.memory_space<vmem>>, %arg24: memref<1x32xf32, #tpu.memory_space<vmem>>, %arg25: memref<4x96xf32, #tpu.memory_space<vmem>>, %arg26: memref<4x32xf32, #tpu.memory_space<vmem>>, %arg27: memref<4x3xf32, #tpu.memory_space<vmem>>) attributes {dimension_semantics = [], scalar_prefetch = 0 : i64, scratch_operands = 0 : i64, tpu.core_type = #tpu.core_type<tc>} {
    %c0 = arith.constant 0 : index
    %c0_0 = arith.constant 0 : index
    %0 = vector.load %arg0[%c0, %c0_0] : memref<4x16xf32, #tpu.memory_space<vmem>>, vector<4x16xf32>
    %c0_1 = arith.constant 0 : index
    %c0_2 = arith.constant 0 : index
    %1 = vector.load %arg3[%c0_1, %c0_2] : memref<16x32xf32, #tpu.memory_space<vmem>>, vector<16x32xf32>
    %cst = arith.constant dense<0.000000e+00> : vector<4x32xf32>
    %2 = tpu.matmul %0, %1, %cst {dimension_numbers = #tpu.dot_dimension_numbers<[1], [0], [0], [1], [0, 0, 1, 1], [], []>} : vector<4x16xf32>, vector<16x32xf32>, vector<4x32xf32> -> vector<4x32xf32>
    %c0_3 = arith.constant 0 : index
    %c0_4 = arith.constant 0 : index
    %3 = vector.load %arg4[%c0_3, %c0_4] : memref<1x32xf32, #tpu.memory_space<vmem>>, vector<1x32xf32>
    %4 = vector.broadcast %3 : vector<1x32xf32> to vector<4x32xf32>
    %5 = arith.addf %2, %4 : vector<4x32xf32>
    %c0_5 = arith.constant 0 : index
    %c0_6 = arith.constant 0 : index
    %6 = vector.load %arg5[%c0_5, %c0_6] : memref<1x32xf32, #tpu.memory_space<vmem>>, vector<1x32xf32>
    %c0_7 = arith.constant 0 : index
    %c0_8 = arith.constant 0 : index
    %7 = vector.load %arg6[%c0_7, %c0_8] : memref<1x32xf32, #tpu.memory_space<vmem>>, vector<1x32xf32>
    %cst_9 = arith.constant dense<0.000000e+00> : vector<4xf32>
    %8 = vector.multi_reduction <add>, %5, %cst_9 [1] : vector<4x32xf32> to vector<4xf32>
    %9 = vector.shape_cast %8 : vector<4xf32> to vector<4x1xf32>
    %cst_10 = arith.constant 3.200000e+01 : f32
    %10 = vector.broadcast %cst_10 : f32 to vector<4x1xf32>
    %11 = arith.divf %9, %10 : vector<4x1xf32>
    %12 = vector.broadcast %11 : vector<4x1xf32> to vector<4x32xf32>
    %13 = arith.subf %5, %12 : vector<4x32xf32>
    %14 = arith.mulf %13, %13 : vector<4x32xf32>
    %cst_11 = arith.constant dense<0.000000e+00> : vector<4xf32>
    %15 = vector.multi_reduction <add>, %14, %cst_11 [1] : vector<4x32xf32> to vector<4xf32>
    %16 = vector.shape_cast %15 : vector<4xf32> to vector<4x1xf32>
    %cst_12 = arith.constant 3.200000e+01 : f32
    %17 = vector.broadcast %cst_12 : f32 to vector<4x1xf32>
    %18 = arith.divf %16, %17 : vector<4x1xf32>
    %19 = vector.broadcast %11 : vector<4x1xf32> to vector<4x32xf32>
    %20 = arith.subf %5, %19 : vector<4x32xf32>
    %cst_13 = arith.constant 9.99999974E-6 : f32
    %21 = vector.broadcast %cst_13 : f32 to vector<4x1xf32>
    %22 = arith.addf %18, %21 : vector<4x1xf32>
    %23 = math.rsqrt %22 : vector<4x1xf32>
    %24 = vector.broadcast %23 : vector<4x1xf32> to vector<4x32xf32>
    %25 = arith.mulf %20, %24 : vector<4x32xf32>
    %26 = vector.broadcast %6 : vector<1x32xf32> to vector<4x32xf32>
    %27 = arith.mulf %25, %26 : vector<4x32xf32>
    %28 = vector.broadcast %7 : vector<1x32xf32> to vector<4x32xf32>
    %29 = arith.addf %27, %28 : vector<4x32xf32>
    %cst_14 = arith.constant 0.000000e+00 : f32
    %30 = vector.broadcast %cst_14 : f32 to vector<4x32xf32>
    %31 = arith.maximumf %29, %30 : vector<4x32xf32>
    %c0_15 = arith.constant 0 : index
    %c0_16 = arith.constant 0 : index
    %32 = vector.load %arg1[%c0_15, %c0_16] : memref<4x48xf32, #tpu.memory_space<vmem>>, vector<4x48xf32>
    %c0_17 = arith.constant 0 : index
    %c0_18 = arith.constant 0 : index
    %33 = vector.load %arg7[%c0_17, %c0_18] : memref<48x32xf32, #tpu.memory_space<vmem>>, vector<48x32xf32>
    %cst_19 = arith.constant dense<0.000000e+00> : vector<4x32xf32>
    %34 = tpu.matmul %32, %33, %cst_19 {dimension_numbers = #tpu.dot_dimension_numbers<[1], [0], [0], [1], [0, 0, 1, 1], [], []>} : vector<4x48xf32>, vector<48x32xf32>, vector<4x32xf32> -> vector<4x32xf32>
    %c0_20 = arith.constant 0 : index
    %c0_21 = arith.constant 0 : index
    %35 = vector.load %arg8[%c0_20, %c0_21] : memref<1x32xf32, #tpu.memory_space<vmem>>, vector<1x32xf32>
    %36 = vector.broadcast %35 : vector<1x32xf32> to vector<4x32xf32>
    %37 = arith.addf %34, %36 : vector<4x32xf32>
    %c0_22 = arith.constant 0 : index
    %c0_23 = arith.constant 0 : index
    %38 = vector.load %arg9[%c0_22, %c0_23] : memref<1x32xf32, #tpu.memory_space<vmem>>, vector<1x32xf32>
    %c0_24 = arith.constant 0 : index
    %c0_25 = arith.constant 0 : index
    %39 = vector.load %arg10[%c0_24, %c0_25] : memref<1x32xf32, #tpu.memory_space<vmem>>, vector<1x32xf32>
    %cst_26 = arith.constant dense<0.000000e+00> : vector<4xf32>
    %40 = vector.multi_reduction <add>, %37, %cst_26 [1] : vector<4x32xf32> to vector<4xf32>
    %41 = vector.shape_cast %40 : vector<4xf32> to vector<4x1xf32>
    %cst_27 = arith.constant 3.200000e+01 : f32
    %42 = vector.broadcast %cst_27 : f32 to vector<4x1xf32>
    %43 = arith.divf %41, %42 : vector<4x1xf32>
    %44 = vector.broadcast %43 : vector<4x1xf32> to vector<4x32xf32>
    %45 = arith.subf %37, %44 : vector<4x32xf32>
    %46 = arith.mulf %45, %45 : vector<4x32xf32>
    %cst_28 = arith.constant dense<0.000000e+00> : vector<4xf32>
    %47 = vector.multi_reduction <add>, %46, %cst_28 [1] : vector<4x32xf32> to vector<4xf32>
    %48 = vector.shape_cast %47 : vector<4xf32> to vector<4x1xf32>
    %cst_29 = arith.constant 3.200000e+01 : f32
    %49 = vector.broadcast %cst_29 : f32 to vector<4x1xf32>
    %50 = arith.divf %48, %49 : vector<4x1xf32>
    %51 = vector.broadcast %43 : vector<4x1xf32> to vector<4x32xf32>
    %52 = arith.subf %37, %51 : vector<4x32xf32>
    %cst_30 = arith.constant 9.99999974E-6 : f32
    %53 = vector.broadcast %cst_30 : f32 to vector<4x1xf32>
    %54 = arith.addf %50, %53 : vector<4x1xf32>
    %55 = math.rsqrt %54 : vector<4x1xf32>
    %56 = vector.broadcast %55 : vector<4x1xf32> to vector<4x32xf32>
    %57 = arith.mulf %52, %56 : vector<4x32xf32>
    %58 = vector.broadcast %38 : vector<1x32xf32> to vector<4x32xf32>
    %59 = arith.mulf %57, %58 : vector<4x32xf32>
    %60 = vector.broadcast %39 : vector<1x32xf32> to vector<4x32xf32>
    %61 = arith.addf %59, %60 : vector<4x32xf32>
    %cst_31 = arith.constant 0.000000e+00 : f32
    %62 = vector.broadcast %cst_31 : f32 to vector<4x32xf32>
    %63 = arith.maximumf %61, %62 : vector<4x32xf32>
    %c0_32 = arith.constant 0 : index
    %c0_33 = arith.constant 0 : index
    %64 = vector.load %arg2[%c0_32, %c0_33] : memref<4x24xf32, #tpu.memory_space<vmem>>, vector<4x24xf32>
    %c0_34 = arith.constant 0 : index
    %c0_35 = arith.constant 0 : index
    %65 = vector.load %arg11[%c0_34, %c0_35] : memref<24x32xf32, #tpu.memory_space<vmem>>, vector<24x32xf32>
    %cst_36 = arith.constant dense<0.000000e+00> : vector<4x32xf32>
    %66 = tpu.matmul %64, %65, %cst_36 {dimension_numbers = #tpu.dot_dimension_numbers<[1], [0], [0], [1], [0, 0, 1, 1], [], []>} : vector<4x24xf32>, vector<24x32xf32>, vector<4x32xf32> -> vector<4x32xf32>
    %c0_37 = arith.constant 0 : index
    %c0_38 = arith.constant 0 : index
    %67 = vector.load %arg12[%c0_37, %c0_38] : memref<1x32xf32, #tpu.memory_space<vmem>>, vector<1x32xf32>
    %68 = vector.broadcast %67 : vector<1x32xf32> to vector<4x32xf32>
    %69 = arith.addf %66, %68 : vector<4x32xf32>
    %c0_39 = arith.constant 0 : index
    %c0_40 = arith.constant 0 : index
    %70 = vector.load %arg13[%c0_39, %c0_40] : memref<1x32xf32, #tpu.memory_space<vmem>>, vector<1x32xf32>
    %c0_41 = arith.constant 0 : index
    %c0_42 = arith.constant 0 : index
    %71 = vector.load %arg14[%c0_41, %c0_42] : memref<1x32xf32, #tpu.memory_space<vmem>>, vector<1x32xf32>
    %cst_43 = arith.constant dense<0.000000e+00> : vector<4xf32>
    %72 = vector.multi_reduction <add>, %69, %cst_43 [1] : vector<4x32xf32> to vector<4xf32>
    %73 = vector.shape_cast %72 : vector<4xf32> to vector<4x1xf32>
    %cst_44 = arith.constant 3.200000e+01 : f32
    %74 = vector.broadcast %cst_44 : f32 to vector<4x1xf32>
    %75 = arith.divf %73, %74 : vector<4x1xf32>
    %76 = vector.broadcast %75 : vector<4x1xf32> to vector<4x32xf32>
    %77 = arith.subf %69, %76 : vector<4x32xf32>
    %78 = arith.mulf %77, %77 : vector<4x32xf32>
    %cst_45 = arith.constant dense<0.000000e+00> : vector<4xf32>
    %79 = vector.multi_reduction <add>, %78, %cst_45 [1] : vector<4x32xf32> to vector<4xf32>
    %80 = vector.shape_cast %79 : vector<4xf32> to vector<4x1xf32>
    %cst_46 = arith.constant 3.200000e+01 : f32
    %81 = vector.broadcast %cst_46 : f32 to vector<4x1xf32>
    %82 = arith.divf %80, %81 : vector<4x1xf32>
    %83 = vector.broadcast %75 : vector<4x1xf32> to vector<4x32xf32>
    %84 = arith.subf %69, %83 : vector<4x32xf32>
    %cst_47 = arith.constant 9.99999974E-6 : f32
    %85 = vector.broadcast %cst_47 : f32 to vector<4x1xf32>
    %86 = arith.addf %82, %85 : vector<4x1xf32>
    %87 = math.rsqrt %86 : vector<4x1xf32>
    %88 = vector.broadcast %87 : vector<4x1xf32> to vector<4x32xf32>
    %89 = arith.mulf %84, %88 : vector<4x32xf32>
    %90 = vector.broadcast %70 : vector<1x32xf32> to vector<4x32xf32>
    %91 = arith.mulf %89, %90 : vector<4x32xf32>
    %92 = vector.broadcast %71 : vector<1x32xf32> to vector<4x32xf32>
    %93 = arith.addf %91, %92 : vector<4x32xf32>
    %cst_48 = arith.constant 0.000000e+00 : f32
    %94 = vector.broadcast %cst_48 : f32 to vector<4x32xf32>
    %95 = arith.maximumf %93, %94 : vector<4x32xf32>
    %96 = tpu.concatenate %31, %63, %95 in 1 : vector<4x32xf32>, vector<4x32xf32>, vector<4x32xf32> -> vector<4x96xf32>
    %c0_49 = arith.constant 0 : index
    %c0_50 = arith.constant 0 : index
    %97 = vector.load %arg15[%c0_49, %c0_50] : memref<96x96xf32, #tpu.memory_space<vmem>>, vector<96x96xf32>
    %cst_51 = arith.constant dense<0.000000e+00> : vector<4x96xf32>
    %98 = tpu.matmul %96, %97, %cst_51 {dimension_numbers = #tpu.dot_dimension_numbers<[1], [0], [0], [1], [0, 0, 1, 1], [], []>} : vector<4x96xf32>, vector<96x96xf32>, vector<4x96xf32> -> vector<4x96xf32>
    %c0_52 = arith.constant 0 : index
    %c0_53 = arith.constant 0 : index
    %99 = vector.load %arg16[%c0_52, %c0_53] : memref<1x96xf32, #tpu.memory_space<vmem>>, vector<1x96xf32>
    %100 = vector.broadcast %99 : vector<1x96xf32> to vector<4x96xf32>
    %101 = arith.addf %98, %100 : vector<4x96xf32>
    %102 = arith.addf %96, %101 : vector<4x96xf32>
    %c0_54 = arith.constant 0 : index
    %c0_55 = arith.constant 0 : index
    %103 = vector.load %arg25[%c0_54, %c0_55] : memref<4x96xf32, #tpu.memory_space<vmem>>, vector<4x96xf32>
    tpu.vector_store %arg25[%c0_54, %c0_55], %102 {strides = array<i32>} : memref<4x96xf32, #tpu.memory_space<vmem>>, vector<4x96xf32>,
    %c0_56 = arith.constant 0 : index
    %c0_57 = arith.constant 0 : index
    %104 = vector.load %arg17[%c0_56, %c0_57] : memref<96x96xf32, #tpu.memory_space<vmem>>, vector<96x96xf32>
    %cst_58 = arith.constant dense<0.000000e+00> : vector<4x96xf32>
    %105 = tpu.matmul %102, %104, %cst_58 {dimension_numbers = #tpu.dot_dimension_numbers<[1], [0], [0], [1], [0, 0, 1, 1], [], []>} : vector<4x96xf32>, vector<96x96xf32>, vector<4x96xf32> -> vector<4x96xf32>
    %c0_59 = arith.constant 0 : index
    %c0_60 = arith.constant 0 : index
    %106 = vector.load %arg18[%c0_59, %c0_60] : memref<1x96xf32, #tpu.memory_space<vmem>>, vector<1x96xf32>
    %107 = vector.broadcast %106 : vector<1x96xf32> to vector<4x96xf32>
    %108 = arith.addf %105, %107 : vector<4x96xf32>
    %109 = vector.extract_strided_slice %108 {offsets = [0, 0], sizes = [4, 32], strides = [1, 1]} : vector<4x96xf32> to vector<4x32xf32>
    %cst_61 = arith.constant 0.000000e+00 : f32
    %110 = vector.broadcast %cst_61 : f32 to vector<4x32xf32>
    %111 = arith.maximumf %109, %110 : vector<4x32xf32>
    %112 = vector.extract_strided_slice %108 {offsets = [0, 32], sizes = [4, 32], strides = [1, 1]} : vector<4x96xf32> to vector<4x32xf32>
    %113 = arith.negf %112 : vector<4x32xf32>
    %114 = math.exp %113 : vector<4x32xf32>
    %cst_62 = arith.constant 1.000000e+00 : f32
    %115 = vector.broadcast %cst_62 : f32 to vector<4x32xf32>
    %116 = arith.addf %115, %114 : vector<4x32xf32>
    %117 = arith.divf %115, %116 : vector<4x32xf32>
    %118 = vector.extract_strided_slice %108 {offsets = [0, 64], sizes = [4, 32], strides = [1, 1]} : vector<4x96xf32> to vector<4x32xf32>
    %119 = math.tanh %118 : vector<4x32xf32>
    %c0_63 = arith.constant 0 : index
    %c0_64 = arith.constant 0 : index
    %120 = vector.load %arg19[%c0_63, %c0_64] : memref<32x3xf32, #tpu.memory_space<vmem>>, vector<32x3xf32>
    %cst_65 = arith.constant dense<0.000000e+00> : vector<4x3xf32>
    %121 = tpu.matmul %111, %120, %cst_65 {dimension_numbers = #tpu.dot_dimension_numbers<[1], [0], [0], [1], [0, 0, 1, 1], [], []>} : vector<4x32xf32>, vector<32x3xf32>, vector<4x3xf32> -> vector<4x3xf32>
    %c0_66 = arith.constant 0 : index
    %c0_67 = arith.constant 0 : index
    %122 = vector.load %arg20[%c0_66, %c0_67] : memref<1x3xf32, #tpu.memory_space<vmem>>, vector<1x3xf32>
    %123 = vector.broadcast %122 : vector<1x3xf32> to vector<4x3xf32>
    %124 = arith.addf %121, %123 : vector<4x3xf32>
    %cst_68 = arith.constant dense<0xFF800000> : vector<4xf32>
    %125 = vector.multi_reduction <maximumf>, %124, %cst_68 [1] : vector<4x3xf32> to vector<4xf32>
    %126 = vector.shape_cast %125 : vector<4xf32> to vector<4x1xf32>
    %127 = vector.broadcast %126 : vector<4x1xf32> to vector<4x3xf32>
    %128 = arith.subf %124, %127 : vector<4x3xf32>
    %129 = math.exp %128 : vector<4x3xf32>
    %cst_69 = arith.constant dense<0.000000e+00> : vector<4xf32>
    %130 = vector.multi_reduction <add>, %129, %cst_69 [1] : vector<4x3xf32> to vector<4xf32>
    %131 = vector.shape_cast %130 : vector<4xf32> to vector<4x1xf32>
    %132 = tpu.reciprocal %131 {approx = true} : vector<4x1xf32> -> vector<4x1xf32>
    %133 = vector.broadcast %132 : vector<4x1xf32> to vector<4x3xf32>
    %134 = arith.mulf %129, %133 : vector<4x3xf32>
    %c0_70 = arith.constant 0 : index
    %c0_71 = arith.constant 0 : index
    %135 = vector.load %arg27[%c0_70, %c0_71] : memref<4x3xf32, #tpu.memory_space<vmem>>, vector<4x3xf32>
    tpu.vector_store %arg27[%c0_70, %c0_71], %134 {strides = array<i32>} : memref<4x3xf32, #tpu.memory_space<vmem>>, vector<4x3xf32>,
    %136 = arith.mulf %117, %119 : vector<4x32xf32>
    %c0_72 = arith.constant 0 : index
    %c0_73 = arith.constant 0 : index
    %137 = vector.load %arg21[%c0_72, %c0_73] : memref<32x32xf32, #tpu.memory_space<vmem>>, vector<32x32xf32>
    %cst_74 = arith.constant dense<0.000000e+00> : vector<4x32xf32>
    %138 = tpu.matmul %136, %137, %cst_74 {dimension_numbers = #tpu.dot_dimension_numbers<[1], [0], [0], [1], [0, 0, 1, 1], [], []>} : vector<4x32xf32>, vector<32x32xf32>, vector<4x32xf32> -> vector<4x32xf32>
    %c0_75 = arith.constant 0 : index
    %c0_76 = arith.constant 0 : index
    %139 = vector.load %arg22[%c0_75, %c0_76] : memref<1x32xf32, #tpu.memory_space<vmem>>, vector<1x32xf32>
    %140 = vector.broadcast %139 : vector<1x32xf32> to vector<4x32xf32>
    %141 = arith.addf %138, %140 : vector<4x32xf32>
    %c0_77 = arith.constant 0 : index
    %c0_78 = arith.constant 0 : index
    %142 = vector.load %arg23[%c0_77, %c0_78] : memref<1x32xf32, #tpu.memory_space<vmem>>, vector<1x32xf32>
    %c0_79 = arith.constant 0 : index
    %c0_80 = arith.constant 0 : index
    %143 = vector.load %arg24[%c0_79, %c0_80] : memref<1x32xf32, #tpu.memory_space<vmem>>, vector<1x32xf32>
    %cst_81 = arith.constant dense<0.000000e+00> : vector<4xf32>
    %144 = vector.multi_reduction <add>, %141, %cst_81 [1] : vector<4x32xf32> to vector<4xf32>
    %145 = vector.shape_cast %144 : vector<4xf32> to vector<4x1xf32>
    %cst_82 = arith.constant 3.200000e+01 : f32
    %146 = vector.broadcast %cst_82 : f32 to vector<4x1xf32>
    %147 = arith.divf %145, %146 : vector<4x1xf32>
    %148 = vector.broadcast %147 : vector<4x1xf32> to vector<4x32xf32>
    %149 = arith.subf %141, %148 : vector<4x32xf32>
    %150 = arith.mulf %149, %149 : vector<4x32xf32>
    %cst_83 = arith.constant dense<0.000000e+00> : vector<4xf32>
    %151 = vector.multi_reduction <add>, %150, %cst_83 [1] : vector<4x32xf32> to vector<4xf32>
    %152 = vector.shape_cast %151 : vector<4xf32> to vector<4x1xf32>
    %cst_84 = arith.constant 3.200000e+01 : f32
    %153 = vector.broadcast %cst_84 : f32 to vector<4x1xf32>
    %154 = arith.divf %152, %153 : vector<4x1xf32>
    %155 = vector.broadcast %147 : vector<4x1xf32> to vector<4x32xf32>
    %156 = arith.subf %141, %155 : vector<4x32xf32>
    %cst_85 = arith.constant 9.99999974E-6 : f32
    %157 = vector.broadcast %cst_85 : f32 to vector<4x1xf32>
    %158 = arith.addf %154, %157 : vector<4x1xf32>
    %159 = math.rsqrt %158 : vector<4x1xf32>
    %160 = vector.broadcast %159 : vector<4x1xf32> to vector<4x32xf32>
    %161 = arith.mulf %156, %160 : vector<4x32xf32>
    %162 = vector.broadcast %142 : vector<1x32xf32> to vector<4x32xf32>
    %163 = arith.mulf %161, %162 : vector<4x32xf32>
    %164 = vector.broadcast %143 : vector<1x32xf32> to vector<4x32xf32>
    %165 = arith.addf %163, %164 : vector<4x32xf32>
    %c0_86 = arith.constant 0 : index
    %c0_87 = arith.constant 0 : index
    %166 = vector.load %arg26[%c0_86, %c0_87] : memref<4x32xf32, #tpu.memory_space<vmem>>, vector<4x32xf32>
    tpu.vector_store %arg26[%c0_86, %c0_87], %165 {strides = array<i32>} : memref<4x32xf32, #tpu.memory_space<vmem>>, vector<4x32xf32>,
    return
  }
}

</mosaic_0001>

<llo_original>
// kernel: tpu_custom_call.1
$region0: #{tpu_custom_call.1}
  #allocation0 [shape = 'u32[]', space=smem, size = 0x4, offset = 0x4, fixed_abs, tag = 'smem constant byte address 0x4 - core index']
  #allocation1 [shape = 'u32[144,128]{1,0:T(1,128)}', space=vmem, size = 0x12000, scoped, tag = 'internal scratch']
  %s0 = inlined_call_operand.vmem [shape: f32[4,16], index: 0, kind: input, shape index: {}]
  %s1 = inlined_call_operand.hbm [shape: f32[4,48], index: 1, kind: input, shape index: {}]
  %s2 = inlined_call_operand.hbm [shape: f32[4,24], index: 2, kind: input, shape index: {}]
  %s3 = inlined_call_operand.vmem [shape: f32[16,32], index: 3, kind: input, shape index: {}]
  %s4 = inlined_call_operand.hbm [shape: f32[1,32], index: 4, kind: input, shape index: {}]
  %s5 = inlined_call_operand.hbm [shape: f32[1,32], index: 5, kind: input, shape index: {}]
  %s6 = inlined_call_operand.hbm [shape: f32[1,32], index: 6, kind: input, shape index: {}]
  %s7 = inlined_call_operand.vmem [shape: f32[48,32], index: 7, kind: input, shape index: {}]
  %s8 = inlined_call_operand.hbm [shape: f32[1,32], index: 8, kind: input, shape index: {}]
  %s9 = inlined_call_operand.hbm [shape: f32[1,32], index: 9, kind: input, shape index: {}]
  %s10 = inlined_call_operand.hbm [shape: f32[1,32], index: 10, kind: input, shape index: {}]
  %s11 = inlined_call_operand.vmem [shape: f32[24,32], index: 11, kind: input, shape index: {}]
  %s12 = inlined_call_operand.hbm [shape: f32[1,32], index: 12, kind: input, shape index: {}]
  %s13 = inlined_call_operand.hbm [shape: f32[1,32], index: 13, kind: input, shape index: {}]
  %s14 = inlined_call_operand.hbm [shape: f32[1,32], index: 14, kind: input, shape index: {}]
  %s15 = inlined_call_operand.vmem [shape: f32[96,96], index: 15, kind: input, shape index: {}]
  %s16 = inlined_call_operand.hbm [shape: f32[1,96], index: 16, kind: input, shape index: {}]
  %s17 = inlined_call_operand.hbm [shape: f32[96,96], index: 17, kind: input, shape index: {}]
  %s18 = inlined_call_operand.vmem [shape: f32[1,96], index: 18, kind: input, shape index: {}]
  %s19 = inlined_call_operand.vmem [shape: f32[32,3], index: 19, kind: input, shape index: {}]
  %s20 = inlined_call_operand.vmem [shape: f32[1,3], index: 20, kind: input, shape index: {}]
  %s21 = inlined_call_operand.vmem [shape: f32[32,32], index: 21, kind: input, shape index: {}]
  %s22 = inlined_call_operand.vmem [shape: f32[1,32], index: 22, kind: input, shape index: {}]
  %s23 = inlined_call_operand.vmem [shape: f32[1,32], index: 23, kind: input, shape index: {}]
  %s24 = inlined_call_operand.vmem [shape: f32[1,32], index: 24, kind: input, shape index: {}]
  %s25 = inlined_call_operand.hbm [shape: f32[4,96], index: 25, kind: output, shape index: {0}]
  %s26 = inlined_call_operand.hbm [shape: f32[4,32], index: 26, kind: output, shape index: {1}]
  %s27 = inlined_call_operand.hbm [shape: f32[4,3], index: 27, kind: output, shape index: {2}]
  %28 = xla_tuple %s25, %s26, %s27
  %s29 = sld [smem:[#allocation0]]
  $region178: #{tpu_custom_call.1} parent=0
    _
  %s31 = ssub.s32 1, %s29
  %s32 = scalar_select 0, %s31, %s29
  $region1: #{tpu_custom_call.1} parent=0
    #allocation2 [shape = 'u8[2048]{0}', space=vmem, size = 0x800, scoped, tag = 'input window, operand 1, single buffered']
    #allocation3 [shape = 's32[1]{0}', space=sflag, size = 0x4, scoped, tag = 'scoped memory for tpu_custom_call.1']
    #allocation4 [shape = 's32[1]{0}', space=sflag, size = 0x4, scoped, tag = 'scoped memory for tpu_custom_call.1']
    #allocation5 [shape = 'u8[2048]{0}', space=vmem, size = 0x800, scoped, tag = 'input window, operand 2, single buffered']
    #allocation6 [shape = 's32[1]{0}', space=sflag, size = 0x4, scoped, tag = 'scoped memory for tpu_custom_call.1']
    #allocation7 [shape = 'u8[512]{0}', space=vmem, size = 0x400, scoped, tag = 'input window, operand 4, single buffered']
    #allocation8 [shape = 'u8[512]{0}', space=vmem, size = 0x400, scoped, tag = 'input window, operand 5, single buffered']
    #allocation9 [shape = 's32[1]{0}', space=sflag, size = 0x4, scoped, tag = 'scoped memory for tpu_custom_call.1']
    #allocation10 [shape = 'u8[512]{0}', space=vmem, size = 0x400, scoped, tag = 'input window, operand 6, single buffered']
    #allocation11 [shape = 'u8[512]{0}', space=vmem, size = 0x400, scoped, tag = 'input window, operand 8, single buffered']
    #allocation12 [shape = 's32[1]{0}', space=sflag, size = 0x4, scoped, tag = 'scoped memory for tpu_custom_call.1']
    #allocation13 [shape = 'u8[512]{0}', space=vmem, size = 0x400, scoped, tag = 'input window, operand 9, single buffered']
    #allocation14 [shape = 'u8[512]{0}', space=vmem, size = 0x400, scoped, tag = 'input window, operand 10, single buffered']
    #allocation15 [shape = 's32[1]{0}', space=sflag, size = 0x4, scoped, tag = 'scoped memory for tpu_custom_call.1']
    #allocation16 [shape = 'u8[512]{0}', space=vmem, size = 0x400, scoped, tag = 'input window, operand 12, single buffered']
    #allocation17 [shape = 'u8[512]{0}', space=vmem, size = 0x400, scoped, tag = 'input window, operand 13, single buffered']
    #allocation18 [shape = 's32[1]{0}', space=sflag, size = 0x4, scoped, tag = 'scoped memory for tpu_custom_call.1']
    #allocation19 [shape = 'u8[512]{0}', space=vmem, size = 0x400, scoped, tag = 'input window, operand 14, single buffered']
    #allocation20 [shape = 'u8[512]{0}', space=vmem, size = 0x400, scoped, tag = 'input window, operand 16, single buffered']
    #allocation21 [shape = 's32[1]{0}', space=sflag, size = 0x4, scoped, tag = 'scoped memory for tpu_custom_call.1']
    #allocation22 [shape = 'u8[49152]{0}', space=vmem, size = 0xc000, scoped, tag = 'input window, operand 17, single buffered']
    #allocation23 [shape = 'u8[2048]{0}', space=vmem, size = 0x800, scoped, tag = 'output window, operand 0, single buffered']
    #allocation24 [shape = 'u8[2048]{0}', space=vmem, size = 0x800, scoped, tag = 'output window, operand 1, single buffered']
    #allocation25 [shape = 's32[1]{0}', space=sflag, size = 0x4, scoped, tag = 'scoped memory for tpu_custom_call.1']
    #allocation26 [shape = 'u8[2048]{0}', space=vmem, size = 0x800, scoped, tag = 'output window, operand 2, single buffered']
    %33 = vsyncpa [#allocation3], 0
    %34 = vsyncpa [#allocation6], 0
    %35 = vsyncpa [#allocation9], 0
    %36 = vsyncpa [#allocation12], 0
    %37 = vsyncpa [#allocation15], 0
    %38 = vsyncpa [#allocation18], 0
    %39 = vsyncpa [#allocation21], 0
    %40 = vsyncpa [#allocation4], 0
    %41 = vsyncpa [#allocation25], 0
    // Predicated region
    $region2: #{tpu_custom_call.1} parent=1 // pred_check
      _
    $region3: #{tpu_custom_call.1} parent=1 // pred_check_branch
      %43 = sbr.rel (0) target = $region5
    $region4: #{tpu_custom_call.1} parent=1 // pred_region
      _
    $region5: #{tpu_custom_call.1} parent=1 // pred_fallthru
      _
    // Predicated region
    $region6: #{tpu_custom_call.1} parent=1 // pred_check
      _
    $region7: #{tpu_custom_call.1} parent=1 // pred_check_branch
      %45 = sbr.rel (0) target = $region9
    $region8: #{tpu_custom_call.1} parent=1 // pred_region
      %s47 = ssub.s32 64, 64
      %48 = vsyncadd [#allocation3], %s47
      %s50 = sshll.u32 [#allocation2], 4
      %s51 = int_to_ptr.vmem [resolvable:$true] %s50
      %53 = dma.hbm_to_vmem [thread:$0]  %s1, 64, %s51, [#allocation3]
    $region9: #{tpu_custom_call.1} parent=1 // pred_fallthru
      _
    // Predicated region
    $region10: #{tpu_custom_call.1} parent=1 // pred_check
      _
    $region11: #{tpu_custom_call.1} parent=1 // pred_check_branch
      %55 = sbr.rel (0) target = $region13
    $region12: #{tpu_custom_call.1} parent=1 // pred_region
      %s57 = ssub.s32 64, 64
      %58 = vsyncadd [#allocation6], %s57
      %s60 = sshll.u32 [#allocation5], 4
      %s61 = int_to_ptr.vmem [resolvable:$true] %s60
      %63 = dma.hbm_to_vmem [thread:$0]  %s2, 64, %s61, [#allocation6]
    $region13: #{tpu_custom_call.1} parent=1 // pred_fallthru
      _
    // Predicated region
    $region14: #{tpu_custom_call.1} parent=1 // pred_check
      _
    $region15: #{tpu_custom_call.1} parent=1 // pred_check_branch
      %65 = sbr.rel (0) target = $region17
    $region16: #{tpu_custom_call.1} parent=1 // pred_region
      _
    $region17: #{tpu_custom_call.1} parent=1 // pred_fallthru
      _
    // Predicated region
    $region18: #{tpu_custom_call.1} parent=1 // pred_check
      _
    $region19: #{tpu_custom_call.1} parent=1 // pred_check_branch
      %67 = sbr.rel (0) target = $region21
    $region20: #{tpu_custom_call.1} parent=1 // pred_region
      %s69 = ssub.s32 16, 16
      %70 = vsyncadd [#allocation6], %s69
      %s72 = sshll.u32 [#allocation7], 4
      %s73 = int_to_ptr.vmem [resolvable:$true] %s72
      %75 = dma.hbm_to_vmem [thread:$0]  %s4, 16, %s73, [#allocation6]
    $region21: #{tpu_custom_call.1} parent=1 // pred_fallthru
      _
    // Predicated region
    $region22: #{tpu_custom_call.1} parent=1 // pred_check
      _
    $region23: #{tpu_custom_call.1} parent=1 // pred_check_branch
      %77 = sbr.rel (0) target = $region25
    $region24: #{tpu_custom_call.1} parent=1 // pred_region
      %s79 = ssub.s32 16, 16
      %80 = vsyncadd [#allocation9], %s79
      %s82 = sshll.u32 [#allocation8], 4
      %s83 = int_to_ptr.vmem [resolvable:$true] %s82
      %85 = dma.hbm_to_vmem [thread:$0]  %s5, 16, %s83, [#allocation9]
    $region25: #{tpu_custom_call.1} parent=1 // pred_fallthru
      _
    // Predicated region
    $region26: #{tpu_custom_call.1} parent=1 // pred_check
      _
    $region27: #{tpu_custom_call.1} parent=1 // pred_check_branch
      %87 = sbr.rel (0) target = $region29
    $region28: #{tpu_custom_call.1} parent=1 // pred_region
      %s89 = ssub.s32 16, 16
      %90 = vsyncadd [#allocation9], %s89
      %s92 = sshll.u32 [#allocation10], 4
      %s93 = int_to_ptr.vmem [resolvable:$true] %s92
      %95 = dma.hbm_to_vmem [thread:$0]  %s6, 16, %s93, [#allocation9]
    $region29: #{tpu_custom_call.1} parent=1 // pred_fallthru
      _
    // Predicated region
    $region30: #{tpu_custom_call.1} parent=1 // pred_check
      _
    $region31: #{tpu_custom_call.1} parent=1 // pred_check_branch
      %97 = sbr.rel (0) target = $region33
    $region32: #{tpu_custom_call.1} parent=1 // pred_region
      _
    $region33: #{tpu_custom_call.1} parent=1 // pred_fallthru
      _
    // Predicated region
    $region34: #{tpu_custom_call.1} parent=1 // pred_check
      _
    $region35: #{tpu_custom_call.1} parent=1 // pred_check_branch
      %99 = sbr.rel (0) target = $region37
    $region36: #{tpu_custom_call.1} parent=1 // pred_region
      %s101 = ssub.s32 16, 16
      %102 = vsyncadd [#allocation12], %s101
      %s104 = sshll.u32 [#allocation11], 4
      %s105 = int_to_ptr.vmem [resolvable:$true] %s104
      %107 = dma.hbm_to_vmem [thread:$0]  %s8, 16, %s105, [#allocation12]
    $region37: #{tpu_custom_call.1} parent=1 // pred_fallthru
      _
    // Predicated region
    $region38: #{tpu_custom_call.1} parent=1 // pred_check
      _
    $region39: #{tpu_custom_call.1} parent=1 // pred_check_branch
      %109 = sbr.rel (0) target = $region41
    $region40: #{tpu_custom_call.1} parent=1 // pred_region
      %s111 = ssub.s32 16, 16
      %112 = vsyncadd [#allocation12], %s111
      %s114 = sshll.u32 [#allocation13], 4
      %s115 = int_to_ptr.vmem [resolvable:$true] %s114
      %117 = dma.hbm_to_vmem [thread:$0]  %s9, 16, %s115, [#allocation12]
    $region41: #{tpu_custom_call.1} parent=1 // pred_fallthru
      _
    // Predicated region
    $region42: #{tpu_custom_call.1} parent=1 // pred_check
      _
    $region43: #{tpu_custom_call.1} parent=1 // pred_check_branch
      %119 = sbr.rel (0) target = $region45
    $region44: #{tpu_custom_call.1} parent=1 // pred_region
      %s121 = ssub.s32 16, 16
      %122 = vsyncadd [#allocation15], %s121
      %s124 = sshll.u32 [#allocation14], 4
      %s125 = int_to_ptr.vmem [resolvable:$true] %s124
      %127 = dma.hbm_to_vmem [thread:$0]  %s10, 16, %s125, [#allocation15]
    $region45: #{tpu_custom_call.1} parent=1 // pred_fallthru
      _
    // Predicated region
    $region46: #{tpu_custom_call.1} parent=1 // pred_check
      _
    $region47: #{tpu_custom_call.1} parent=1 // pred_check_branch
      %129 = sbr.rel (0) target = $region49
    $region48: #{tpu_custom_call.1} parent=1 // pred_region
      _
    $region49: #{tpu_custom_call.1} parent=1 // pred_fallthru
      _
    // Predicated region
    $region50: #{tpu_custom_call.1} parent=1 // pred_check
      _
    $region51: #{tpu_custom_call.1} parent=1 // pred_check_branch
      %131 = sbr.rel (0) target = $region53
    $region52: #{tpu_custom_call.1} parent=1 // pred_region
      %s133 = ssub.s32 16, 16
      %134 = vsyncadd [#allocation15], %s133
      %s136 = sshll.u32 [#allocation16], 4
      %s137 = int_to_ptr.vmem [resolvable:$true] %s136
      %139 = dma.hbm_to_vmem [thread:$0]  %s12, 16, %s137, [#allocation15]
    $region53: #{tpu_custom_call.1} parent=1 // pred_fallthru
      _
    // Predicated region
    $region54: #{tpu_custom_call.1} parent=1 // pred_check
      _
    $region55: #{tpu_custom_call.1} parent=1 // pred_check_branch
      %141 = sbr.rel (0) target = $region57
    $region56: #{tpu_custom_call.1} parent=1 // pred_region
      %s143 = ssub.s32 16, 16
      %144 = vsyncadd [#allocation18], %s143
      %s146 = sshll.u32 [#allocation17], 4
      %s147 = int_to_ptr.vmem [resolvable:$true] %s146
      %149 = dma.hbm_to_vmem [thread:$0]  %s13, 16, %s147, [#allocation18]
    $region57: #{tpu_custom_call.1} parent=1 // pred_fallthru
      _
    // Predicated region
    $region58: #{tpu_custom_call.1} parent=1 // pred_check
      _
    $region59: #{tpu_custom_call.1} parent=1 // pred_check_branch
      %151 = sbr.rel (0) target = $region61
    $region60: #{tpu_custom_call.1} parent=1 // pred_region
      %s153 = ssub.s32 16, 16
      %154 = vsyncadd [#allocation18], %s153
      %s156 = sshll.u32 [#allocation19], 4
      %s157 = int_to_ptr.vmem [resolvable:$true] %s156
      %159 = dma.hbm_to_vmem [thread:$0]  %s14, 16, %s157, [#allocation18]
    $region61: #{tpu_custom_call.1} parent=1 // pred_fallthru
      _
    // Predicated region
    $region62: #{tpu_custom_call.1} parent=1 // pred_check
      _
    $region63: #{tpu_custom_call.1} parent=1 // pred_check_branch
      %161 = sbr.rel (0) target = $region65
    $region64: #{tpu_custom_call.1} parent=1 // pred_region
      _
    $region65: #{tpu_custom_call.1} parent=1 // pred_fallthru
      _
    // Predicated region
    $region66: #{tpu_custom_call.1} parent=1 // pred_check
      _
    $region67: #{tpu_custom_call.1} parent=1 // pred_check_branch
      %163 = sbr.rel (0) target = $region69
    $region68: #{tpu_custom_call.1} parent=1 // pred_region
      %s165 = ssub.s32 16, 16
      %166 = vsyncadd [#allocation21], %s165
      %s168 = sshll.u32 [#allocation20], 4
      %s169 = int_to_ptr.vmem [resolvable:$true] %s168
      %171 = dma.hbm_to_vmem [thread:$0]  %s16, 16, %s169, [#allocation21]
    $region69: #{tpu_custom_call.1} parent=1 // pred_fallthru
      _
    // Predicated region
    $region70: #{tpu_custom_call.1} parent=1 // pred_check
      _
    $region71: #{tpu_custom_call.1} parent=1 // pred_check_branch
      %173 = sbr.rel (0) target = $region73
    $region72: #{tpu_custom_call.1} parent=1 // pred_region
      %s175 = ssub.s32 1536, 1536
      %176 = vsyncadd [#allocation21], %s175
      %s177 = sshll.u32 [#allocation22], 4
      %s178 = int_to_ptr.vmem [resolvable:$true] %s177
      %183 = dma.hbm_to_vmem [thread:$0]  %s17, 1536, %s178, [#allocation21], 128, 128, 8
    $region73: #{tpu_custom_call.1} parent=1 // pred_fallthru
      _
    // Predicated region
    $region74: #{tpu_custom_call.1} parent=1 // pred_check
      _
    $region75: #{tpu_custom_call.1} parent=1 // pred_check_branch
      %185 = sbr.rel (0) target = $region77
    $region76: #{tpu_custom_call.1} parent=1 // pred_region
      _
    $region77: #{tpu_custom_call.1} parent=1 // pred_fallthru
      _
    // Predicated region
    $region78: #{tpu_custom_call.1} parent=1 // pred_check
      _
    $region79: #{tpu_custom_call.1} parent=1 // pred_check_branch
      %187 = sbr.rel (0) target = $region81
    $region80: #{tpu_custom_call.1} parent=1 // pred_region
      _
    $region81: #{tpu_custom_call.1} parent=1 // pred_fallthru
      _
    // Predicated region
    $region82: #{tpu_custom_call.1} parent=1 // pred_check
      _
    $region83: #{tpu_custom_call.1} parent=1 // pred_check_branch
      %189 = sbr.rel (0) target = $region85
    $region84: #{tpu_custom_call.1} parent=1 // pred_region
      _
    $region85: #{tpu_custom_call.1} parent=1 // pred_fallthru
      _
    // Predicated region
    $region86: #{tpu_custom_call.1} parent=1 // pred_check
      _
    $region87: #{tpu_custom_call.1} parent=1 // pred_check_branch
      %191 = sbr.rel (0) target = $region89
    $region88: #{tpu_custom_call.1} parent=1 // pred_region
      _
    $region89: #{tpu_custom_call.1} parent=1 // pred_fallthru
      _
    // Predicated region
    $region90: #{tpu_custom_call.1} parent=1 // pred_check
      _
    $region91: #{tpu_custom_call.1} parent=1 // pred_check_branch
      %193 = sbr.rel (0) target = $region93
    $region92: #{tpu_custom_call.1} parent=1 // pred_region
      _
    $region93: #{tpu_custom_call.1} parent=1 // pred_fallthru
      _
    // Predicated region
    $region94: #{tpu_custom_call.1} parent=1 // pred_check
      _
    $region95: #{tpu_custom_call.1} parent=1 // pred_check_branch
      %195 = sbr.rel (0) target = $region97
    $region96: #{tpu_custom_call.1} parent=1 // pred_region
      _
    $region97: #{tpu_custom_call.1} parent=1 // pred_fallthru
      _
    // Predicated region
    $region98: #{tpu_custom_call.1} parent=1 // pred_check
      _
    $region99: #{tpu_custom_call.1} parent=1 // pred_check_branch
      %197 = sbr.rel (0) target = $region101
    $region100: #{tpu_custom_call.1} parent=1 // pred_region
      _
    $region101: #{tpu_custom_call.1} parent=1 // pred_fallthru
      _
    // Predicated region
    $region102: #{tpu_custom_call.1} parent=1 // pred_check
      _
    $region103: #{tpu_custom_call.1} parent=1 // pred_check_branch
      %199 = sbr.rel (0) target = $region105
    $region104: #{tpu_custom_call.1} parent=1 // pred_region
      %200 = dma.done [#allocation3], 64
    $region105: #{tpu_custom_call.1} parent=1 // pred_fallthru
      _
    // Predicated region
    $region106: #{tpu_custom_call.1} parent=1 // pred_check
      _
    $region107: #{tpu_custom_call.1} parent=1 // pred_check_branch
      %202 = sbr.rel (0) target = $region109
    $region108: #{tpu_custom_call.1} parent=1 // pred_region
      %203 = dma.done [#allocation6], 64
    $region109: #{tpu_custom_call.1} parent=1 // pred_fallthru
      _
    // Predicated region
    $region110: #{tpu_custom_call.1} parent=1 // pred_check
      _
    $region111: #{tpu_custom_call.1} parent=1 // pred_check_branch
      %205 = sbr.rel (0) target = $region113
    $region112: #{tpu_custom_call.1} parent=1 // pred_region
      %206 = dma.done [#allocation6], 16
    $region113: #{tpu_custom_call.1} parent=1 // pred_fallthru
      _
    // Predicated region
    $region114: #{tpu_custom_call.1} parent=1 // pred_check
      _
    $region115: #{tpu_custom_call.1} parent=1 // pred_check_branch
      %208 = sbr.rel (0) target = $region117
    $region116: #{tpu_custom_call.1} parent=1 // pred_region
      %209 = dma.done [#allocation9], 16
    $region117: #{tpu_custom_call.1} parent=1 // pred_fallthru
      _
    // Predicated region
    $region118: #{tpu_custom_call.1} parent=1 // pred_check
      _
    $region119: #{tpu_custom_call.1} parent=1 // pred_check_branch
      %211 = sbr.rel (0) target = $region121
    $region120: #{tpu_custom_call.1} parent=1 // pred_region
      %212 = dma.done [#allocation9], 16
    $region121: #{tpu_custom_call.1} parent=1 // pred_fallthru
      _
    // Predicated region
    $region122: #{tpu_custom_call.1} parent=1 // pred_check
      _
    $region123: #{tpu_custom_call.1} parent=1 // pred_check_branch
      %214 = sbr.rel (0) target = $region125
    $region124: #{tpu_custom_call.1} parent=1 // pred_region
      %215 = dma.done [#allocation12], 16
    $region125: #{tpu_custom_call.1} parent=1 // pred_fallthru
      _
    // Predicated region
    $region126: #{tpu_custom_call.1} parent=1 // pred_check
      _
    $region127: #{tpu_custom_call.1} parent=1 // pred_check_branch
      %217 = sbr.rel (0) target = $region129
    $region128: #{tpu_custom_call.1} parent=1 // pred_region
      %218 = dma.done [#allocation12], 16
    $region129: #{tpu_custom_call.1} parent=1 // pred_fallthru
      _
    // Predicated region
    $region130: #{tpu_custom_call.1} parent=1 // pred_check
      _
    $region131: #{tpu_custom_call.1} parent=1 // pred_check_branch
      %220 = sbr.rel (0) target = $region133
    $region132: #{tpu_custom_call.1} parent=1 // pred_region
      %221 = dma.done [#allocation15], 16
    $region133: #{tpu_custom_call.1} parent=1 // pred_fallthru
      _
    // Predicated region
    $region134: #{tpu_custom_call.1} parent=1 // pred_check
      _
    $region135: #{tpu_custom_call.1} parent=1 // pred_check_branch
      %223 = sbr.rel (0) target = $region137
    $region136: #{tpu_custom_call.1} parent=1 // pred_region
      %224 = dma.done [#allocation15], 16
    $region137: #{tpu_custom_call.1} parent=1 // pred_fallthru
      _
    // Predicated region
    $region138: #{tpu_custom_call.1} parent=1 // pred_check
      _
    $region139: #{tpu_custom_call.1} parent=1 // pred_check_branch
      %226 = sbr.rel (0) target = $region141
    $region140: #{tpu_custom_call.1} parent=1 // pred_region
      %227 = dma.done [#allocation18], 16
    $region141: #{tpu_custom_call.1} parent=1 // pred_fallthru
      _
    // Predicated region
    $region142: #{tpu_custom_call.1} parent=1 // pred_check
      _
    $region143: #{tpu_custom_call.1} parent=1 // pred_check_branch
      %229 = sbr.rel (0) target = $region145
    $region144: #{tpu_custom_call.1} parent=1 // pred_region
      %230 = dma.done [#allocation18], 16
    $region145: #{tpu_custom_call.1} parent=1 // pred_fallthru
      _
    // Predicated region
    $region146: #{tpu_custom_call.1} parent=1 // pred_check
      _
    $region147: #{tpu_custom_call.1} parent=1 // pred_check_branch
      %232 = sbr.rel (0) target = $region149
    $region148: #{tpu_custom_call.1} parent=1 // pred_region
      %233 = dma.done [#allocation21], 16
    $region149: #{tpu_custom_call.1} parent=1 // pred_fallthru
      _
    // Predicated region
    $region150: #{tpu_custom_call.1} parent=1 // pred_check
      _
    $region151: #{tpu_custom_call.1} parent=1 // pred_check_branch
      %235 = sbr.rel (0) target = $region153
    $region152: #{tpu_custom_call.1} parent=1 // pred_region
      %236 = dma.done [#allocation21], 1536
    $region153: #{tpu_custom_call.1} parent=1 // pred_fallthru
      _
    %v237 = vld [vmem:[%s0] sm:$0xf]
    %v238 = vld [vmem:[%s3] sm:$0xff]
    %v239 = vld [vmem:[%s3 + $0x8] sm:$0xff]
    %v240 = vld [vmem:[#allocation7] sm:$0x1]
    %v242 = vlaneseq
    %v243 = vshrl.u32 %v242, 7
    %v244 = vsub.s32 0, %v243
    %v245 = vrot.slane %v240, %v244
    %vm247 = vcmask 130048
    %v249 = vsel %vm247, %v237, 0
    %251 = vmatprep.subr.mxu0 0.0
    %252 = vmatpush1.msra.mxu0 %v238
    %253 = vmatprep.subr.mxu0 0.0
    %254 = vmatpush1.msra.mxu0 %v239
    %255 = vmatprep.subr.mxu0 0.0
    %256 = vmatpush1.msra.mxu0 0.0
    %257 = vmatprep.subr.mxu0 0.0
    %258 = vmatpush1.msra.mxu0 0.0
    %259 = vmatprep.subr.mxu0 0.0
    %260 = vmatpush1.msra.mxu0 0.0
    %261 = vmatprep.subr.mxu0 0.0
    %262 = vmatpush1.msra.mxu0 0.0
    %263 = vmatprep.subr.mxu0 0.0
    %264 = vmatpush1.msra.mxu0 0.0
    %265 = vmatprep.subr.mxu0 0.0
    %266 = vmatpush1.msra.mxu0 0.0
    %267 = vmatprep.subr.mxu0 0.0
    %268 = vmatpush1.msra.mxu0 0.0
    %269 = vmatprep.subr.mxu0 0.0
    %270 = vmatpush1.msra.mxu0 0.0
    %271 = vmatprep.subr.mxu0 0.0
    %272 = vmatpush1.msra.mxu0 0.0
    %273 = vmatprep.subr.mxu0 0.0
    %274 = vmatpush1.msra.mxu0 0.0
    %275 = vmatprep.subr.mxu0 0.0
    %276 = vmatpush1.msra.mxu0 0.0
    %277 = vmatprep.subr.mxu0 0.0
    %278 = vmatpush1.msra.mxu0 0.0
    %279 = vmatprep.subr.mxu0 0.0
    %280 = vmatpush1.msra.mxu0 0.0
    %281 = vmatprep.subr.mxu0 0.0
    %282 = vmatpush1.msra.mxu0 0.0
    %283 = vmatprep.subr.mxu0 0.0
    %284 = vmatpush1.msra.mxu0 0.0
    %285 = vmatprep.subr.mxu0 0.0
    %286 = vmatpush1.msra.mxu0 0.0
    %287 = vmatprep.subr.mxu0 0.0
    %288 = vmatpush1.msra.mxu0 0.0
    %289 = vmatprep.subr.mxu0 0.0
    %290 = vmatpush1.msra.mxu0 0.0
    %291 = vmatprep.subr.mxu0 0.0
    %292 = vmatpush1.msra.mxu0 0.0
    %293 = vmatprep.subr.mxu0 0.0
    %294 = vmatpush1.msra.mxu0 0.0
    %295 = vmatprep.subr.mxu0 0.0
    %296 = vmatpush1.msra.mxu0 0.0
    %297 = vmatprep.subr.mxu0 0.0
    %298 = vmatpush1.msra.mxu0 0.0
    %299 = vmatprep.subr.mxu0 0.0
    %300 = vmatpush1.msra.mxu0 0.0
    %301 = vmatprep.subr.mxu0 0.0
    %302 = vmatpush1.msra.mxu0 0.0
    %303 = vmatprep.subr.mxu0 0.0
    %304 = vmatpush1.msra.mxu0 0.0
    %305 = vmatprep.subr.mxu0 0.0
    %306 = vmatpush1.msra.mxu0 0.0
    %307 = vmatprep.subr.mxu0 0.0
    %308 = vmatpush1.msra.mxu0 0.0
    %309 = vmatprep.subr.mxu0 0.0
    %310 = vmatpush1.msra.mxu0 0.0
    %311 = vmatprep.subr.mxu0 0.0
    %312 = vmatpush1.msra.mxu0 0.0
    %313 = vmatprep.subr.mxu0 0.0
    %314 = vmatpush1.msra.mxu0 0.0
    %315 = vmatprep.mubr.f32.mxu0 0.0
    %316 = vmatmul.mubr.f32.gmra.mrb[0].mxu0 %v249
    %v317 = vpop.f32.mrb[0].mxu0
    %v318 = vadd.f32 %v245, %v317
    %v319 = vpop.f32.mrb[0].mxu0
    %320 = vdwg.mxu0
    %v321 = vld [vmem:[#allocation8] sm:$0x1]
    %v322 = vld [vmem:[#allocation10] sm:$0x1]
    %vm323 = vcmask 257024
    %v324 = vsel %vm323, %v318, 0.0
    %325 = vadd.xlane.f32.xlu0 %v324
    %v326 = vpop.xlane.xlu0 %325
    %v327 = vrcp.pop 32.0
    %v328 = vmul.f32 %v326, %v327
    %v329 = vsub.f32 %v318, %v328
    %v330 = vmul.f32 %v329, %v329
    %v331 = vsel %vm323, %v330, 0.0
    %332 = vadd.xlane.f32.xlu0 %v331
    %v333 = vpop.xlane.xlu0 %332
    %v334 = vmul.f32 %v333, %v327
    %v335 = vadd.f32 %v334, 1e-05
    %v336 = vrsqrt.pop %v335
    %v337 = vmul.f32 %v329, %v336
    %v339 = vlaneseq
    %v340 = vshrl.u32 %v339, 7
    %v341 = vsub.s32 0, %v340
    %v342 = vrot.slane %v321, %v341
    %v344 = vmul.f32 %v337, %v342
    %v346 = vlaneseq
    %v347 = vshrl.u32 %v346, 7
    %v348 = vsub.s32 0, %v347
    %v349 = vrot.slane %v322, %v348
    %v351 = vadd.f32 %v344, %v349
    %v352 = vmax.f32 %v351, 0.0
    %v353 = vld [vmem:[#allocation2] sm:$0xf]
    %v354 = vld [vmem:[%s7] sm:$0xff]
    %v355 = vld [vmem:[%s7 + $0x8] sm:$0xff]
    %v356 = vld [vmem:[%s7 + $0x10] sm:$0xff]
    %v357 = vld [vmem:[%s7 + $0x18] sm:$0xff]
    %v358 = vld [vmem:[%s7 + $0x20] sm:$0xff]
    %v359 = vld [vmem:[%s7 + $0x28] sm:$0xff]
    %v360 = vld [vmem:[#allocation11] sm:$0x1]
    %v362 = vlaneseq
    %v363 = vshrl.u32 %v362, 7
    %v364 = vsub.s32 0, %v363
    %v365 = vrot.slane %v360, %v364
    %vm367 = vcmask 392192
    %v369 = vsel %vm367, %v353, 0
    %371 = vmatprep.subr.mxu0 0.0
    %372 = vmatpush1.msra.mxu0 %v354
    %373 = vmatprep.subr.mxu0 0.0
    %374 = vmatpush1.msra.mxu0 %v355
    %375 = vmatprep.subr.mxu0 0.0
    %376 = vmatpush1.msra.mxu0 %v356
    %377 = vmatprep.subr.mxu0 0.0
    %378 = vmatpush1.msra.mxu0 %v357
    %379 = vmatprep.subr.mxu0 0.0
    %380 = vmatpush1.msra.mxu0 %v358
    %381 = vmatprep.subr.mxu0 0.0
    %382 = vmatpush1.msra.mxu0 %v359
    %383 = vmatprep.subr.mxu0 0.0
    %384 = vmatpush1.msra.mxu0 0.0
    %385 = vmatprep.subr.mxu0 0.0
    %386 = vmatpush1.msra.mxu0 0.0
    %387 = vmatprep.subr.mxu0 0.0
    %388 = vmatpush1.msra.mxu0 0.0
    %389 = vmatprep.subr.mxu0 0.0
    %390 = vmatpush1.msra.mxu0 0.0
    %391 = vmatprep.subr.mxu0 0.0
    %392 = vmatpush1.msra.mxu0 0.0
    %393 = vmatprep.subr.mxu0 0.0
    %394 = vmatpush1.msra.mxu0 0.0
    %395 = vmatprep.subr.mxu0 0.0
    %396 = vmatpush1.msra.mxu0 0.0
    %397 = vmatprep.subr.mxu0 0.0
    %398 = vmatpush1.msra.mxu0 0.0
    %399 = vmatprep.subr.mxu0 0.0
    %400 = vmatpush1.msra.mxu0 0.0
    %401 = vmatprep.subr.mxu0 0.0
    %402 = vmatpush1.msra.mxu0 0.0
    %403 = vmatprep.subr.mxu0 0.0
    %404 = vmatpush1.msra.mxu0 0.0
    %405 = vmatprep.subr.mxu0 0.0
    %406 = vmatpush1.msra.mxu0 0.0
    %407 = vmatprep.subr.mxu0 0.0
    %408 = vmatpush1.msra.mxu0 0.0
    %409 = vmatprep.subr.mxu0 0.0
    %410 = vmatpush1.msra.mxu0 0.0
    %411 = vmatprep.subr.mxu0 0.0
    %412 = vmatpush1.msra.mxu0 0.0
    %413 = vmatprep.subr.mxu0 0.0
    %414 = vmatpush1.msra.mxu0 0.0
    %415 = vmatprep.subr.mxu0 0.0
    %416 = vmatpush1.msra.mxu0 0.0
    %417 = vmatprep.subr.mxu0 0.0
    %418 = vmatpush1.msra.mxu0 0.0
    %419 = vmatprep.subr.mxu0 0.0
    %420 = vmatpush1.msra.mxu0 0.0
    %421 = vmatprep.subr.mxu0 0.0
    %422 = vmatpush1.msra.mxu0 0.0
    %423 = vmatprep.subr.mxu0 0.0
    %424 = vmatpush1.msra.mxu0 0.0
    %425 = vmatprep.subr.mxu0 0.0
    %426 = vmatpush1.msra.mxu0 0.0
    %427 = vmatprep.subr.mxu0 0.0
    %428 = vmatpush1.msra.mxu0 0.0
    %429 = vmatprep.subr.mxu0 0.0
    %430 = vmatpush1.msra.mxu0 0.0
    %431 = vmatprep.subr.mxu0 0.0
    %432 = vmatpush1.msra.mxu0 0.0
    %433 = vmatprep.subr.mxu0 0.0
    %434 = vmatpush1.msra.mxu0 0.0
    %435 = vmatprep.mubr.f32.mxu0 0.0
    %436 = vmatmul.mubr.f32.gmra.mrb[0].mxu0 %v369
    %v437 = vpop.f32.mrb[0].mxu0
    %v438 = vadd.f32 %v365, %v437
    %v439 = vpop.f32.mrb[0].mxu0
    %440 = vdwg.mxu0
    %v441 = vld [vmem:[#allocation13] sm:$0x1]
    %v442 = vld [vmem:[#allocation14] sm:$0x1]
    %v443 = vsel %vm323, %v438, 0.0
    %444 = vadd.xlane.f32.xlu0 %v443
    %v445 = vpop.xlane.xlu0 %444
    %v446 = vmul.f32 %v445, %v327
    %v447 = vsub.f32 %v438, %v446
    %v448 = vmul.f32 %v447, %v447
    %v449 = vsel %vm323, %v448, 0.0
    %450 = vadd.xlane.f32.xlu0 %v449
    %v451 = vpop.xlane.xlu0 %450
    %v452 = vmul.f32 %v451, %v327
    %v453 = vadd.f32 %v452, 1e-05
    %v454 = vrsqrt.pop %v453
    %v455 = vmul.f32 %v447, %v454
    %v457 = vlaneseq
    %v458 = vshrl.u32 %v457, 7
    %v459 = vsub.s32 0, %v458
    %v460 = vrot.slane %v441, %v459
    %v462 = vmul.f32 %v455, %v460
    %v464 = vlaneseq
    %v465 = vshrl.u32 %v464, 7
    %v466 = vsub.s32 0, %v465
    %v467 = vrot.slane %v442, %v466
    %v469 = vadd.f32 %v462, %v467
    %v470 = vmax.f32 %v469, 0.0
    %v471 = vld [vmem:[#allocation5] sm:$0xf]
    %v472 = vld [vmem:[%s11] sm:$0xff]
    %v473 = vld [vmem:[%s11 + $0x8] sm:$0xff]
    %v474 = vld [vmem:[%s11 + $0x10] sm:$0xff]
    %v475 = vld [vmem:[#allocation16] sm:$0x1]
    %v477 = vlaneseq
    %v478 = vshrl.u32 %v477, 7
    %v479 = vsub.s32 0, %v478
    %v480 = vrot.slane %v475, %v479
    %vm482 = vcmask 195584
    %v484 = vsel %vm482, %v471, 0
    %486 = vmatprep.subr.mxu0 0.0
    %487 = vmatpush1.msra.mxu0 %v472
    %488 = vmatprep.subr.mxu0 0.0
    %489 = vmatpush1.msra.mxu0 %v473
    %490 = vmatprep.subr.mxu0 0.0
    %491 = vmatpush1.msra.mxu0 %v474
    %492 = vmatprep.subr.mxu0 0.0
    %493 = vmatpush1.msra.mxu0 0.0
    %494 = vmatprep.subr.mxu0 0.0
    %495 = vmatpush1.msra.mxu0 0.0
    %496 = vmatprep.subr.mxu0 0.0
    %497 = vmatpush1.msra.mxu0 0.0
    %498 = vmatprep.subr.mxu0 0.0
    %499 = vmatpush1.msra.mxu0 0.0
    %500 = vmatprep.subr.mxu0 0.0
    %501 = vmatpush1.msra.mxu0 0.0
    %502 = vmatprep.subr.mxu0 0.0
    %503 = vmatpush1.msra.mxu0 0.0
    %504 = vmatprep.subr.mxu0 0.0
    %505 = vmatpush1.msra.mxu0 0.0
    %506 = vmatprep.subr.mxu0 0.0
    %507 = vmatpush1.msra.mxu0 0.0
    %508 = vmatprep.subr.mxu0 0.0
    %509 = vmatpush1.msra.mxu0 0.0
    %510 = vmatprep.subr.mxu0 0.0
    %511 = vmatpush1.msra.mxu0 0.0
    %512 = vmatprep.subr.mxu0 0.0
    %513 = vmatpush1.msra.mxu0 0.0
    %514 = vmatprep.subr.mxu0 0.0
    %515 = vmatpush1.msra.mxu0 0.0
    %516 = vmatprep.subr.mxu0 0.0
    %517 = vmatpush1.msra.mxu0 0.0
    %518 = vmatprep.subr.mxu0 0.0
    %519 = vmatpush1.msra.mxu0 0.0
    %520 = vmatprep.subr.mxu0 0.0
    %521 = vmatpush1.msra.mxu0 0.0
    %522 = vmatprep.subr.mxu0 0.0
    %523 = vmatpush1.msra.mxu0 0.0
    %524 = vmatprep.subr.mxu0 0.0
    %525 = vmatpush1.msra.mxu0 0.0
    %526 = vmatprep.subr.mxu0 0.0
    %527 = vmatpush1.msra.mxu0 0.0
    %528 = vmatprep.subr.mxu0 0.0
    %529 = vmatpush1.msra.mxu0 0.0
    %530 = vmatprep.subr.mxu0 0.0
    %531 = vmatpush1.msra.mxu0 0.0
    %532 = vmatprep.subr.mxu0 0.0
    %533 = vmatpush1.msra.mxu0 0.0
    %534 = vmatprep.subr.mxu0 0.0
    %535 = vmatpush1.msra.mxu0 0.0
    %536 = vmatprep.subr.mxu0 0.0
    %537 = vmatpush1.msra.mxu0 0.0
    %538 = vmatprep.subr.mxu0 0.0
    %539 = vmatpush1.msra.mxu0 0.0
    %540 = vmatprep.subr.mxu0 0.0
    %541 = vmatpush1.msra.mxu0 0.0
    %542 = vmatprep.subr.mxu0 0.0
    %543 = vmatpush1.msra.mxu0 0.0
    %544 = vmatprep.subr.mxu0 0.0
    %545 = vmatpush1.msra.mxu0 0.0
    %546 = vmatprep.subr.mxu0 0.0
    %547 = vmatpush1.msra.mxu0 0.0
    %548 = vmatprep.subr.mxu0 0.0
    %549 = vmatpush1.msra.mxu0 0.0
    %550 = vmatprep.mubr.f32.mxu0 0.0
    %551 = vmatmul.mubr.f32.gmra.mrb[0].mxu0 %v484
    %v552 = vpop.f32.mrb[0].mxu0
    %v553 = vadd.f32 %v480, %v552
    %v554 = vpop.f32.mrb[0].mxu0
    %555 = vdwg.mxu0
    %v556 = vld [vmem:[#allocation17] sm:$0x1]
    %v557 = vld [vmem:[#allocation19] sm:$0x1]
    %v558 = vsel %vm323, %v553, 0.0
    %559 = vadd.xlane.f32.xlu0 %v558
    %v560 = vpop.xlane.xlu0 %559
    %v561 = vmul.f32 %v560, %v327
    %v562 = vsub.f32 %v553, %v561
    %v563 = vmul.f32 %v562, %v562
    %v564 = vsel %vm323, %v563, 0.0
    %565 = vadd.xlane.f32.xlu0 %v564
    %v566 = vpop.xlane.xlu0 %565
    %v567 = vmul.f32 %v566, %v327
    %v568 = vadd.f32 %v567, 1e-05
    %v569 = vrsqrt.pop %v568
    %v570 = vmul.f32 %v562, %v569
    %v572 = vlaneseq
    %v573 = vshrl.u32 %v572, 7
    %v574 = vsub.s32 0, %v573
    %v575 = vrot.slane %v556, %v574
    %v577 = vmul.f32 %v570, %v575
    %v579 = vlaneseq
    %v580 = vshrl.u32 %v579, 7
    %v581 = vsub.s32 0, %v580
    %v582 = vrot.slane %v557, %v581
    %v584 = vadd.f32 %v577, %v582
    %v585 = vmax.f32 %v584, 0.0
    %587 = vrot.lane.b32.xlu0 %v470, 32
    %v588 = vpop.permute.xlu0 %587
    %591 = vrot.lane.b32.xlu0 %v585, 64
    %v592 = vpop.permute.xlu0 %591
    %vm594 = vcmask 261120
    %v595 = vsel %vm594, %v352, %v588
    %vm596 = vcmask 523264
    %v597 = vsel %vm596, %v595, %v592
    %v598 = vld [vmem:[%s15] sm:$0xff]
    %v599 = vld [vmem:[%s15 + $0x8] sm:$0xff]
    %v600 = vld [vmem:[%s15 + $0x10] sm:$0xff]
    %v601 = vld [vmem:[%s15 + $0x18] sm:$0xff]
    %v602 = vld [vmem:[%s15 + $0x20] sm:$0xff]
    %v603 = vld [vmem:[%s15 + $0x28] sm:$0xff]
    %v604 = vld [vmem:[%s15 + $0x30] sm:$0xff]
    %v605 = vld [vmem:[%s15 + $0x38] sm:$0xff]
    %v606 = vld [vmem:[%s15 + $0x40] sm:$0xff]
    %v607 = vld [vmem:[%s15 + $0x48] sm:$0xff]
    %v608 = vld [vmem:[%s15 + $0x50] sm:$0xff]
    %v609 = vld [vmem:[%s15 + $0x58] sm:$0xff]
    %v610 = vld [vmem:[#allocation20] sm:$0x1]
    %v612 = vlaneseq
    %v613 = vshrl.u32 %v612, 7
    %v614 = vsub.s32 0, %v613
    %v615 = vrot.slane %v610, %v614
    %vm617 = vcmask 785408
    %v619 = vsel %vm617, %v597, 0
    %621 = vmatprep.subr.mxu0 0.0
    %622 = vmatpush1.msra.mxu0 %v598
    %623 = vmatprep.subr.mxu0 0.0
    %624 = vmatpush1.msra.mxu0 %v599
    %625 = vmatprep.subr.mxu0 0.0
    %626 = vmatpush1.msra.mxu0 %v600
    %627 = vmatprep.subr.mxu0 0.0
    %628 = vmatpush1.msra.mxu0 %v601
    %629 = vmatprep.subr.mxu0 0.0
    %630 = vmatpush1.msra.mxu0 %v602
    %631 = vmatprep.subr.mxu0 0.0
    %632 = vmatpush1.msra.mxu0 %v603
    %633 = vmatprep.subr.mxu0 0.0
    %634 = vmatpush1.msra.mxu0 %v604
    %635 = vmatprep.subr.mxu0 0.0
    %636 = vmatpush1.msra.mxu0 %v605
    %637 = vmatprep.subr.mxu0 0.0
    %638 = vmatpush1.msra.mxu0 %v606
    %639 = vmatprep.subr.mxu0 0.0
    %640 = vmatpush1.msra.mxu0 %v607
    %641 = vmatprep.subr.mxu0 0.0
    %642 = vmatpush1.msra.mxu0 %v608
    %643 = vmatprep.subr.mxu0 0.0
    %644 = vmatpush1.msra.mxu0 %v609
    %645 = vmatprep.subr.mxu0 0.0
    %646 = vmatpush1.msra.mxu0 0.0
    %647 = vmatprep.subr.mxu0 0.0
    %648 = vmatpush1.msra.mxu0 0.0
    %649 = vmatprep.subr.mxu0 0.0
    %650 = vmatpush1.msra.mxu0 0.0
    %651 = vmatprep.subr.mxu0 0.0
    %652 = vmatpush1.msra.mxu0 0.0
    %653 = vmatprep.subr.mxu0 0.0
    %654 = vmatpush1.msra.mxu0 0.0
    %655 = vmatprep.subr.mxu0 0.0
    %656 = vmatpush1.msra.mxu0 0.0
    %657 = vmatprep.subr.mxu0 0.0
    %658 = vmatpush1.msra.mxu0 0.0
    %659 = vmatprep.subr.mxu0 0.0
    %660 = vmatpush1.msra.mxu0 0.0
    %661 = vmatprep.subr.mxu0 0.0
    %662 = vmatpush1.msra.mxu0 0.0
    %663 = vmatprep.subr.mxu0 0.0
    %664 = vmatpush1.msra.mxu0 0.0
    %665 = vmatprep.subr.mxu0 0.0
    %666 = vmatpush1.msra.mxu0 0.0
    %667 = vmatprep.subr.mxu0 0.0
    %668 = vmatpush1.msra.mxu0 0.0
    %669 = vmatprep.subr.mxu0 0.0
    %670 = vmatpush1.msra.mxu0 0.0
    %671 = vmatprep.subr.mxu0 0.0
    %672 = vmatpush1.msra.mxu0 0.0
    %673 = vmatprep.subr.mxu0 0.0
    %674 = vmatpush1.msra.mxu0 0.0
    %675 = vmatprep.subr.mxu0 0.0
    %676 = vmatpush1.msra.mxu0 0.0
    %677 = vmatprep.subr.mxu0 0.0
    %678 = vmatpush1.msra.mxu0 0.0
    %679 = vmatprep.subr.mxu0 0.0
    %680 = vmatpush1.msra.mxu0 0.0
    %681 = vmatprep.subr.mxu0 0.0
    %682 = vmatpush1.msra.mxu0 0.0
    %683 = vmatprep.subr.mxu0 0.0
    %684 = vmatpush1.msra.mxu0 0.0
    %685 = vmatprep.mubr.f32.mxu0 0.0
    %686 = vmatmul.mubr.f32.gmra.mrb[0].mxu0 %v619
    %v687 = vpop.f32.mrb[0].mxu0
    %v688 = vadd.f32 %v615, %v687
    %v689 = vpop.f32.mrb[0].mxu0
    %690 = vdwg.mxu0
    %v691 = vadd.f32 %v597, %v688
    %vm692 = vcmask 781312
    %693 = vst.msk [vmem:[#allocation23] sm:$0xf] %vm692, %v691
    %v694 = vld [vmem:[#allocation22] sm:$0xff]
    %v695 = vld [vmem:[#allocation22 + $0x8] sm:$0xff]
    %v696 = vld [vmem:[#allocation22 + $0x10] sm:$0xff]
    %v697 = vld [vmem:[#allocation22 + $0x18] sm:$0xff]
    %v698 = vld [vmem:[#allocation22 + $0x20] sm:$0xff]
    %v699 = vld [vmem:[#allocation22 + $0x28] sm:$0xff]
    %v700 = vld [vmem:[#allocation22 + $0x30] sm:$0xff]
    %v701 = vld [vmem:[#allocation22 + $0x38] sm:$0xff]
    %v702 = vld [vmem:[#allocation22 + $0x40] sm:$0xff]
    %v703 = vld [vmem:[#allocation22 + $0x48] sm:$0xff]
    %v704 = vld [vmem:[#allocation22 + $0x50] sm:$0xff]
    %v705 = vld [vmem:[#allocation22 + $0x58] sm:$0xff]
    %v706 = vld [vmem:[%s18] sm:$0x1]
    %v708 = vlaneseq
    %v709 = vshrl.u32 %v708, 7
    %v710 = vsub.s32 0, %v709
    %v711 = vrot.slane %v706, %v710
    %v714 = vsel %vm617, %v691, 0
    %716 = vmatprep.subr.mxu0 0.0
    %717 = vmatpush1.msra.mxu0 %v694
    %718 = vmatprep.subr.mxu0 0.0
    %719 = vmatpush1.msra.mxu0 %v695
    %720 = vmatprep.subr.mxu0 0.0
    %721 = vmatpush1.msra.mxu0 %v696
    %722 = vmatprep.subr.mxu0 0.0
    %723 = vmatpush1.msra.mxu0 %v697
    %724 = vmatprep.subr.mxu0 0.0
    %725 = vmatpush1.msra.mxu0 %v698
    %726 = vmatprep.subr.mxu0 0.0
    %727 = vmatpush1.msra.mxu0 %v699
    %728 = vmatprep.subr.mxu0 0.0
    %729 = vmatpush1.msra.mxu0 %v700
    %730 = vmatprep.subr.mxu0 0.0
    %731 = vmatpush1.msra.mxu0 %v701
    %732 = vmatprep.subr.mxu0 0.0
    %733 = vmatpush1.msra.mxu0 %v702
    %734 = vmatprep.subr.mxu0 0.0
    %735 = vmatpush1.msra.mxu0 %v703
    %736 = vmatprep.subr.mxu0 0.0
    %737 = vmatpush1.msra.mxu0 %v704
    %738 = vmatprep.subr.mxu0 0.0
    %739 = vmatpush1.msra.mxu0 %v705
    %740 = vmatprep.subr.mxu0 0.0
    %741 = vmatpush1.msra.mxu0 0.0
    %742 = vmatprep.subr.mxu0 0.0
    %743 = vmatpush1.msra.mxu0 0.0
    %744 = vmatprep.subr.mxu0 0.0
    %745 = vmatpush1.msra.mxu0 0.0
    %746 = vmatprep.subr.mxu0 0.0
    %747 = vmatpush1.msra.mxu0 0.0
    %748 = vmatprep.subr.mxu0 0.0
    %749 = vmatpush1.msra.mxu0 0.0
    %750 = vmatprep.subr.mxu0 0.0
    %751 = vmatpush1.msra.mxu0 0.0
    %752 = vmatprep.subr.mxu0 0.0
    %753 = vmatpush1.msra.mxu0 0.0
    %754 = vmatprep.subr.mxu0 0.0
    %755 = vmatpush1.msra.mxu0 0.0
    %756 = vmatprep.subr.mxu0 0.0
    %757 = vmatpush1.msra.mxu0 0.0
    %758 = vmatprep.subr.mxu0 0.0
    %759 = vmatpush1.msra.mxu0 0.0
    %760 = vmatprep.subr.mxu0 0.0
    %761 = vmatpush1.msra.mxu0 0.0
    %762 = vmatprep.subr.mxu0 0.0
    %763 = vmatpush1.msra.mxu0 0.0
    %764 = vmatprep.subr.mxu0 0.0
    %765 = vmatpush1.msra.mxu0 0.0
    %766 = vmatprep.subr.mxu0 0.0
    %767 = vmatpush1.msra.mxu0 0.0
    %768 = vmatprep.subr.mxu0 0.0
    %769 = vmatpush1.msra.mxu0 0.0
    %770 = vmatprep.subr.mxu0 0.0
    %771 = vmatpush1.msra.mxu0 0.0
    %772 = vmatprep.subr.mxu0 0.0
    %773 = vmatpush1.msra.mxu0 0.0
    %774 = vmatprep.subr.mxu0 0.0
    %775 = vmatpush1.msra.mxu0 0.0
    %776 = vmatprep.subr.mxu0 0.0
    %777 = vmatpush1.msra.mxu0 0.0
    %778 = vmatprep.subr.mxu0 0.0
    %779 = vmatpush1.msra.mxu0 0.0
    %780 = vmatprep.mubr.f32.mxu0 0.0
    %781 = vmatmul.mubr.f32.gmra.mrb[0].mxu0 %v714
    %v782 = vpop.f32.mrb[0].mxu0
    %v783 = vadd.f32 %v711, %v782
    %v784 = vpop.f32.mrb[0].mxu0
    %785 = vdwg.mxu0
    %v786 = vmax.f32 %v783, 0.0
    %v787 = vxor.u32 %v783, 2147483648
    %v788 = vmul.f32 %v787, 1.442695
    %v789 = vpow.pop %v788
    %v790 = vadd.f32 %v789, 1.0
    %v791 = vrcp.pop %v790
    %v792 = vmul.f32 1.0, %v791
    %v793 = vtanh.pop %v783
    %v794 = vld [vmem:[%s19] sm:$0xff]
    %v795 = vld [vmem:[%s19 + $0x8] sm:$0xff]
    %v796 = vld [vmem:[%s19 + $0x10] sm:$0xff]
    %v797 = vld [vmem:[%s19 + $0x18] sm:$0xff]
    %v798 = vld [vmem:[%s20] sm:$0x1]
    %v800 = vlaneseq
    %v801 = vshrl.u32 %v800, 7
    %v802 = vsub.s32 0, %v801
    %v803 = vrot.slane %v798, %v802
    %v806 = vsel %vm594, %v786, 0
    %808 = vmatprep.subr.mxu0 0.0
    %809 = vmatpush1.msra.mxu0 %v794
    %810 = vmatprep.subr.mxu0 0.0
    %811 = vmatpush1.msra.mxu0 %v795
    %812 = vmatprep.subr.mxu0 0.0
    %813 = vmatpush1.msra.mxu0 %v796
    %814 = vmatprep.subr.mxu0 0.0
    %815 = vmatpush1.msra.mxu0 %v797
    %816 = vmatprep.subr.mxu0 0.0
    %817 = vmatpush1.msra.mxu0 0.0
    %818 = vmatprep.subr.mxu0 0.0
    %819 = vmatpush1.msra.mxu0 0.0
    %820 = vmatprep.subr.mxu0 0.0
    %821 = vmatpush1.msra.mxu0 0.0
    %822 = vmatprep.subr.mxu0 0.0
    %823 = vmatpush1.msra.mxu0 0.0
    %824 = vmatprep.subr.mxu0 0.0
    %825 = vmatpush1.msra.mxu0 0.0
    %826 = vmatprep.subr.mxu0 0.0
    %827 = vmatpush1.msra.mxu0 0.0
    %828 = vmatprep.subr.mxu0 0.0
    %829 = vmatpush1.msra.mxu0 0.0
    %830 = vmatprep.subr.mxu0 0.0
    %831 = vmatpush1.msra.mxu0 0.0
    %832 = vmatprep.subr.mxu0 0.0
    %833 = vmatpush1.msra.mxu0 0.0
    %834 = vmatprep.subr.mxu0 0.0
    %835 = vmatpush1.msra.mxu0 0.0
    %836 = vmatprep.subr.mxu0 0.0
    %837 = vmatpush1.msra.mxu0 0.0
    %838 = vmatprep.subr.mxu0 0.0
    %839 = vmatpush1.msra.mxu0 0.0
    %840 = vmatprep.subr.mxu0 0.0
    %841 = vmatpush1.msra.mxu0 0.0
    %842 = vmatprep.subr.mxu0 0.0
    %843 = vmatpush1.msra.mxu0 0.0
    %844 = vmatprep.subr.mxu0 0.0
    %845 = vmatpush1.msra.mxu0 0.0
    %846 = vmatprep.subr.mxu0 0.0
    %847 = vmatpush1.msra.mxu0 0.0
    %848 = vmatprep.subr.mxu0 0.0
    %849 = vmatpush1.msra.mxu0 0.0
    %850 = vmatprep.subr.mxu0 0.0
    %851 = vmatpush1.msra.mxu0 0.0
    %852 = vmatprep.subr.mxu0 0.0
    %853 = vmatpush1.msra.mxu0 0.0
    %854 = vmatprep.subr.mxu0 0.0
    %855 = vmatpush1.msra.mxu0 0.0
    %856 = vmatprep.subr.mxu0 0.0
    %857 = vmatpush1.msra.mxu0 0.0
    %858 = vmatprep.subr.mxu0 0.0
    %859 = vmatpush1.msra.mxu0 0.0
    %860 = vmatprep.subr.mxu0 0.0
    %861 = vmatpush1.msra.mxu0 0.0
    %862 = vmatprep.subr.mxu0 0.0
    %863 = vmatpush1.msra.mxu0 0.0
    %864 = vmatprep.subr.mxu0 0.0
    %865 = vmatpush1.msra.mxu0 0.0
    %866 = vmatprep.subr.mxu0 0.0
    %867 = vmatpush1.msra.mxu0 0.0
    %868 = vmatprep.subr.mxu0 0.0
    %869 = vmatpush1.msra.mxu0 0.0
    %870 = vmatprep.subr.mxu0 0.0
    %871 = vmatpush1.msra.mxu0 0.0
    %872 = vmatprep.mubr.f32.mxu0 0.0
    %873 = vmatmul.mubr.f32.gmra.mrb[0].mxu0 %v806
    %v874 = vpop.f32.mrb[0].mxu0
    %v875 = vadd.f32 %v803, %v874
    %v876 = vpop.f32.mrb[0].mxu0
    %877 = vdwg.mxu0
    %vm878 = vcmask 19456
    %v879 = vsel %vm878, %v875, -inf
    %880 = vmax.xlane.f32.xlu0 %v879
    %v881 = vpop.xlane.xlu0 %880
    %v882 = vsub.f32 %v875, %v881
    %v883 = vmul.f32 %v882, 1.442695
    %v884 = vpow.pop %v883
    %v885 = vsel %vm878, %v884, 0.0
    %886 = vadd.xlane.f32.xlu0 %v885
    %v887 = vpop.xlane.xlu0 %886
    %v888 = vrcp.pop %v887
    %v889 = vmul.f32 %v884, %v888
    %890 = vst.msk [vmem:[#allocation26] sm:$0xf] %vm878, %v889
    %892 = vrot.lane.b32.xlu0 %v793, 96
    %v893 = vpop.permute.xlu0 %892
    %v895 = vmul.f32 %v792, %v893
    %v896 = vld [vmem:[%s21] sm:$0xff]
    %v897 = vld [vmem:[%s21 + $0x8] sm:$0xff]
    %v898 = vld [vmem:[%s21 + $0x10] sm:$0xff]
    %v899 = vld [vmem:[%s21 + $0x18] sm:$0xff]
    %v900 = vld [vmem:[%s22] sm:$0x1]
    %v902 = vlaneseq
    %v903 = vshrl.u32 %v902, 7
    %v904 = vsub.s32 0, %v903
    %v905 = vrot.slane %v900, %v904
    %908 = vrot.lane.b32.xlu0 %v895, 96
    %v909 = vpop.permute.xlu0 %908
    %v910 = vsel %vm594, %v909, 0
    %912 = vmatprep.subr.mxu0 0.0
    %913 = vmatpush1.msra.mxu0 %v896
    %914 = vmatprep.subr.mxu0 0.0
    %915 = vmatpush1.msra.mxu0 %v897
    %916 = vmatprep.subr.mxu0 0.0
    %917 = vmatpush1.msra.mxu0 %v898
    %918 = vmatprep.subr.mxu0 0.0
    %919 = vmatpush1.msra.mxu0 %v899
    %920 = vmatprep.subr.mxu0 0.0
    %921 = vmatpush1.msra.mxu0 0.0
    %922 = vmatprep.subr.mxu0 0.0
    %923 = vmatpush1.msra.mxu0 0.0
    %924 = vmatprep.subr.mxu0 0.0
    %925 = vmatpush1.msra.mxu0 0.0
    %926 = vmatprep.subr.mxu0 0.0
    %927 = vmatpush1.msra.mxu0 0.0
    %928 = vmatprep.subr.mxu0 0.0
    %929 = vmatpush1.msra.mxu0 0.0
    %930 = vmatprep.subr.mxu0 0.0
    %931 = vmatpush1.msra.mxu0 0.0
    %932 = vmatprep.subr.mxu0 0.0
    %933 = vmatpush1.msra.mxu0 0.0
    %934 = vmatprep.subr.mxu0 0.0
    %935 = vmatpush1.msra.mxu0 0.0
    %936 = vmatprep.subr.mxu0 0.0
    %937 = vmatpush1.msra.mxu0 0.0
    %938 = vmatprep.subr.mxu0 0.0
    %939 = vmatpush1.msra.mxu0 0.0
    %940 = vmatprep.subr.mxu0 0.0
    %941 = vmatpush1.msra.mxu0 0.0
    %942 = vmatprep.subr.mxu0 0.0
    %943 = vmatpush1.msra.mxu0 0.0
    %944 = vmatprep.subr.mxu0 0.0
    %945 = vmatpush1.msra.mxu0 0.0
    %946 = vmatprep.subr.mxu0 0.0
    %947 = vmatpush1.msra.mxu0 0.0
    %948 = vmatprep.subr.mxu0 0.0
    %949 = vmatpush1.msra.mxu0 0.0
    %950 = vmatprep.subr.mxu0 0.0
    %951 = vmatpush1.msra.mxu0 0.0
    %952 = vmatprep.subr.mxu0 0.0
    %953 = vmatpush1.msra.mxu0 0.0
    %954 = vmatprep.subr.mxu0 0.0
    %955 = vmatpush1.msra.mxu0 0.0
    %956 = vmatprep.subr.mxu0 0.0
    %957 = vmatpush1.msra.mxu0 0.0
    %958 = vmatprep.subr.mxu0 0.0
    %959 = vmatpush1.msra.mxu0 0.0
    %960 = vmatprep.subr.mxu0 0.0
    %961 = vmatpush1.msra.mxu0 0.0
    %962 = vmatprep.subr.mxu0 0.0
    %963 = vmatpush1.msra.mxu0 0.0
    %964 = vmatprep.subr.mxu0 0.0
    %965 = vmatpush1.msra.mxu0 0.0
    %966 = vmatprep.subr.mxu0 0.0
    %967 = vmatpush1.msra.mxu0 0.0
    %968 = vmatprep.subr.mxu0 0.0
    %969 = vmatpush1.msra.mxu0 0.0
    %970 = vmatprep.subr.mxu0 0.0
    %971 = vmatpush1.msra.mxu0 0.0
    %972 = vmatprep.subr.mxu0 0.0
    %973 = vmatpush1.msra.mxu0 0.0
    %974 = vmatprep.subr.mxu0 0.0
    %975 = vmatpush1.msra.mxu0 0.0
    %976 = vmatprep.mubr.f32.mxu0 0.0
    %977 = vmatmul.mubr.f32.gmra.mrb[0].mxu0 %v910
    %v978 = vpop.f32.mrb[0].mxu0
    %v979 = vadd.f32 %v905, %v978
    %v980 = vpop.f32.mrb[0].mxu0
    %981 = vdwg.mxu0
    %v982 = vld [vmem:[%s23] sm:$0x1]
    %v983 = vld [vmem:[%s24] sm:$0x1]
    %v984 = vsel %vm323, %v979, 0.0
    %985 = vadd.xlane.f32.xlu0 %v984
    %v986 = vpop.xlane.xlu0 %985
    %v987 = vmul.f32 %v986, %v327
    %v988 = vsub.f32 %v979, %v987
    %v989 = vmul.f32 %v988, %v988
    %v990 = vsel %vm323, %v989, 0.0
    %991 = vadd.xlane.f32.xlu0 %v990
    %v992 = vpop.xlane.xlu0 %991
    %v993 = vmul.f32 %v992, %v327
    %v994 = vadd.f32 %v993, 1e-05
    %v995 = vrsqrt.pop %v994
    %v996 = vmul.f32 %v988, %v995
    %v998 = vlaneseq
    %v999 = vshrl.u32 %v998, 7
    %v1000 = vsub.s32 0, %v999
    %v1001 = vrot.slane %v982, %v1000
    %v1003 = vmul.f32 %v996, %v1001
    %v1005 = vlaneseq
    %v1006 = vshrl.u32 %v1005, 7
    %v1007 = vsub.s32 0, %v1006
    %v1008 = vrot.slane %v983, %v1007
    %v1010 = vadd.f32 %v1003, %v1008
    %1011 = vst.msk [vmem:[#allocation24] sm:$0xf] %vm323, %v1010
    // Predicated region
    $region154: #{tpu_custom_call.1} parent=1 // pred_check
      _
    $region155: #{tpu_custom_call.1} parent=1 // pred_check_branch
      %1013 = sbr.rel (0) target = $region157
    $region156: #{tpu_custom_call.1} parent=1 // pred_region
      %s1015 = ssub.s32 64, 64
      %1016 = vsyncadd [#allocation4], %s1015
      %s1018 = sshll.u32 [#allocation23], 4
      %s1019 = int_to_ptr.vmem [resolvable:$true] %s1018
      %1021 = dma.vmem_to_hbm [thread:$0]  %s1019, 64, %s25, [#allocation4]
    $region157: #{tpu_custom_call.1} parent=1 // pred_fallthru
      _
    // Predicated region
    $region158: #{tpu_custom_call.1} parent=1 // pred_check
      _
    $region159: #{tpu_custom_call.1} parent=1 // pred_check_branch
      %1023 = sbr.rel (0) target = $region161
    $region160: #{tpu_custom_call.1} parent=1 // pred_region
      %s1025 = ssub.s32 64, 64
      %1026 = vsyncadd [#allocation25], %s1025
      %s1028 = sshll.u32 [#allocation24], 4
      %s1029 = int_to_ptr.vmem [resolvable:$true] %s1028
      %1031 = dma.vmem_to_hbm [thread:$0]  %s1029, 64, %s26, [#allocation25]
    $region161: #{tpu_custom_call.1} parent=1 // pred_fallthru
      _
    // Predicated region
    $region162: #{tpu_custom_call.1} parent=1 // pred_check
      _
    $region163: #{tpu_custom_call.1} parent=1 // pred_check_branch
      %1033 = sbr.rel (0) target = $region165
    $region164: #{tpu_custom_call.1} parent=1 // pred_region
      %s1035 = ssub.s32 64, 64
      %1036 = vsyncadd [#allocation25], %s1035
      %s1038 = sshll.u32 [#allocation26], 4
      %s1039 = int_to_ptr.vmem [resolvable:$true] %s1038
      %1041 = dma.vmem_to_hbm [thread:$0]  %s1039, 64, %s27, [#allocation25]
    $region165: #{tpu_custom_call.1} parent=1 // pred_fallthru
      _
    // Predicated region
    $region166: #{tpu_custom_call.1} parent=1 // pred_check
      _
    $region167: #{tpu_custom_call.1} parent=1 // pred_check_branch
      %1043 = sbr.rel (0) target = $region169
    $region168: #{tpu_custom_call.1} parent=1 // pred_region
      %1044 = dma.done [#allocation4], 64
    $region169: #{tpu_custom_call.1} parent=1 // pred_fallthru
      _
    // Predicated region
    $region170: #{tpu_custom_call.1} parent=1 // pred_check
      _
    $region171: #{tpu_custom_call.1} parent=1 // pred_check_branch
      %1046 = sbr.rel (0) target = $region173
    $region172: #{tpu_custom_call.1} parent=1 // pred_region
      %1047 = dma.done [#allocation25], 64
    $region173: #{tpu_custom_call.1} parent=1 // pred_fallthru
      _
    // Predicated region
    $region174: #{tpu_custom_call.1} parent=1 // pred_check
      _
    $region175: #{tpu_custom_call.1} parent=1 // pred_check_branch
      %1049 = sbr.rel (0) target = $region177
    $region176: #{tpu_custom_call.1} parent=1 // pred_region
      %1050 = dma.done [#allocation25], 64
    $region177: #{tpu_custom_call.1} parent=1 // pred_fallthru
      _
    %1051 = vsyncpa [#allocation3], 1
    %1052 = vsyncpa [#allocation6], 1
    %1053 = vsyncpa [#allocation9], 1
    %1054 = vsyncpa [#allocation12], 1
    %1055 = vsyncpa [#allocation15], 1
    %1056 = vsyncpa [#allocation18], 1
    %1057 = vsyncpa [#allocation21], 1
    %1058 = vsyncpa [#allocation4], 1
    %1059 = vsyncpa [#allocation25], 1

</llo_original>
